<compile_context>
chip_gen: v5e
topology: v5e:2x2
jax: 0.10.0
libtpu: 0.0.40
codegen_flags: <defaults>
</compile_context>

<pallas_src>
import jax
import jax.numpy as jnp
import numpy as np
from jax.experimental import pallas as pl
from jax.experimental.pallas import tpu as pltpu


# ----------------------------------------------------------------------------- kernel
def linkpred_kernel(
    xu_ref, xi_ref,              # (Nu,H), (Ni,H) bf16: raw embedding rows (pre-ReLU)
    adj_ui_ref, adj_iu_ref,      # (Ni,Nu), (Nu,Ni) bf16: dense 0/1 adjacency, dst-major
    sel_uT_ref, sel_iT_ref,      # (Nu,Ep), (Ni,Ep) bf16: transposed one-hot edge-label selectors
    wu_ref, bu_ref, wi_ref, bi_ref,                  # encoder Linear: (H,H) bf16, (1,H) f32
    wpk_u1_ref, wpk_i1_ref, wpk_u2_ref, wpk_i2_ref,  # lane-packed conv weights (H,2H) bf16
    c1ui_v_ref, c1iu_v_ref, c2ui_v_ref, c2iu_v_ref,  # (4,H) f32: [b_src, b_dst, att, out_bias]
    wcu_ref, wci_ref, bc_ref,                        # classifier rows (1,H) bf16, bias (1,1) f32
    out_ref,                                         # (1, Ep) f32, lane-dense
):
    f32, bf16 = jnp.float32, jnp.bfloat16
    H = wu_ref.shape[0]

    # --- node-type encoders: Linear(ReLU(Embedding)) ; bf16 in / f32 accumulate ---
    xu = jnp.dot(jnp.maximum(xu_ref[...], 0), wu_ref[...],
                 preferred_element_type=f32) + bu_ref[...]                     # (Nu,H) f32
    xi = jnp.dot(jnp.maximum(xi_ref[...], 0), wi_ref[...],
                 preferred_element_type=f32) + bi_ref[...]                     # (Ni,H) f32

    adj_ui = adj_ui_ref[...].astype(f32)                                       # (Ni,Nu)
    adj_iu = adj_iu_ref[...].astype(f32)                                       # (Nu,Ni)

    def gat_attn(hs, hd, adj, att, b_out):
        # Dense-mask GATv2 attention (heads=1, add_self_loops=False, negative_slope=0.2).
        # Score / softmax math in f32; only the MXU aggregation uses bf16 operands.
        z = hd[:, None, :] + hs[None, :, :]                                    # (Nd,Ns,H) f32
        z = jnp.where(z > 0.0, z, 0.2 * z)                                     # leaky_relu(0.2)
        score = jnp.sum(z * att, axis=-1)                                      # (Nd,Ns)
        score = jnp.where(adj > 0.0, score, -1e30)
        m = jnp.max(score, axis=-1, keepdims=True)
        e = jnp.exp(score - m) * adj
        denom = jnp.sum(e, axis=-1, keepdims=True)
        inv = pl.reciprocal(jnp.where(denom > 0.0, denom, 1.0), approx=True)
        alpha = (e * inv).astype(bf16)                                         # (Nd,Ns)
        # Isolated dst rows -> alpha row == 0 -> bias-only output (matches PyG, no self loops).
        return jnp.dot(alpha, hs.astype(bf16), preferred_element_type=f32) + b_out

    def layer(xub, xib, wpk_u_ref, wpk_i_ref, vui_ref, viu_ref):
        # One lane-packed (H,2H) projection per node type feeds BOTH edge types of the layer.
        vui, viu = vui_ref[...], viu_ref[...]                                  # (4,H) f32
        hu = jnp.dot(xub, wpk_u_ref[...], preferred_element_type=f32)          # (Nu,2H)
        hi = jnp.dot(xib, wpk_i_ref[...], preferred_element_type=f32)          # (Ni,2H)
        # ('user','rates','item'): src=user, dst=item
        xi_new = gat_attn(hu[:, :H] + vui[0:1], hi[:, :H] + vui[1:2],
                          adj_ui, vui[2:3], vui[3:4])
        # ('item','rev_rates','user'): src=item, dst=user
        xu_new = gat_attn(hi[:, H:] + viu[0:1], hu[:, H:] + viu[1:2],
                          adj_iu, viu[2:3], viu[3:4])
        return xu_new, xi_new

    # --- hetero GNN layer 1 (+ ReLU per node type), then layer 2 ---
    xu1, xi1 = layer(xu.astype(bf16), xi.astype(bf16),
                     wpk_u1_ref, wpk_i1_ref, c1ui_v_ref, c1iu_v_ref)
    xu1, xi1 = jnp.maximum(xu1, 0.0), jnp.maximum(xi1, 0.0)
    xu2, xi2 = layer(xu1.astype(bf16), xi1.astype(bf16),
                     wpk_u2_ref, wpk_i2_ref, c2ui_v_ref, c2iu_v_ref)

    # --- classifier, reordered: per-node scores first, then edge-label select (lane-dense) ---
    dn = (((1,), (1,)), ((), ()))                                              # A @ B^T
    su = jax.lax.dot_general(wcu_ref[...], xu2.astype(bf16), dn,
                             preferred_element_type=f32)                       # (1,Nu)
    si = jax.lax.dot_general(wci_ref[...], xi2.astype(bf16), dn,
                             preferred_element_type=f32)                       # (1,Ni)
    pred = (jnp.dot(su.astype(bf16), sel_uT_ref[...], preferred_element_type=f32)
            + jnp.dot(si.astype(bf16), sel_iT_ref[...], preferred_element_type=f32)
            + bc_ref[...])                                                     # (1,Ep)
    out_ref[...] = pred


# ----------------------------------------------------------------------------- wrapper
def linkpred_forward(user_id, item_id, edge_ui, edge_label, p):
    bf16 = jnp.bfloat16
    Nu, Ni = user_id.shape[0], item_id.shape[0]
    E = edge_label.shape[1]
    Ep = max(128, ((E + 127) // 128) * 128)          # lane-dense padded output width

    # Glue (layout plumbing only): embedding gathers, dense adjacency, transposed selectors.
    xu_raw = jnp.take(p["emb_user"], user_id, axis=0).astype(bf16)             # (Nu,H)
    xi_raw = jnp.take(p["emb_item"], item_id, axis=0).astype(bf16)             # (Ni,H)

    e_u, e_i = edge_ui[0], edge_ui[1]                                          # src=user, dst=item
    adj_ui = jnp.zeros((Ni, Nu), bf16).at[e_i, e_u].set(1.0)                   # dst-major
    adj_iu = adj_ui.T                                                          # reverse edge type

    ul = jnp.pad(edge_label[0], (0, Ep - E), constant_values=-1)               # -1 never matches
    il = jnp.pad(edge_label[1], (0, Ep - E), constant_values=-1)
    sel_uT = (jnp.arange(Nu, dtype=jnp.int32)[:, None] == ul[None, :]).astype(bf16)   # (Nu,Ep)
    sel_iT = (jnp.arange(Ni, dtype=jnp.int32)[:, None] == il[None, :]).astype(bf16)   # (Ni,Ep)

    def vpack(name):   # (4,H) f32: [b_src, b_dst, att, out_bias]
        return jnp.concatenate([p[name + "_bs"], p[name + "_bd"],
                                p[name + "_att"], p[name + "_bo"]], axis=0)

    # Lane-pack the two projections each node type feeds per layer: (H, 2H) bf16.
    wpk_u1 = jnp.concatenate([p["c1_ui_ws"], p["c1_iu_wd"]], axis=1).astype(bf16)
    wpk_i1 = jnp.concatenate([p["c1_ui_wd"], p["c1_iu_ws"]], axis=1).astype(bf16)
    wpk_u2 = jnp.concatenate([p["c2_ui_ws"], p["c2_iu_wd"]], axis=1).astype(bf16)
    wpk_i2 = jnp.concatenate([p["c2_ui_wd"], p["c2_iu_ws"]], axis=1).astype(bf16)

    inputs = (xu_raw, xi_raw, adj_ui, adj_iu, sel_uT, sel_iT,
              p["wu"].astype(bf16), p["bu"], p["wi"].astype(bf16), p["bi"],
              wpk_u1, wpk_i1, wpk_u2, wpk_i2,
              vpack("c1_ui"), vpack("c1_iu"), vpack("c2_ui"), vpack("c2_iu"),
              p["wc_u"].astype(bf16), p["wc_i"].astype(bf16), p["bc"])

    pred_row = pl.pallas_call(
        linkpred_kernel,
        out_shape=jax.ShapeDtypeStruct((1, Ep), jnp.float32),
        in_specs=[pl.BlockSpec(memory_space=pltpu.MemorySpace.VMEM)] * len(inputs),
        out_specs=pl.BlockSpec(memory_space=pltpu.MemorySpace.VMEM),
    )(*inputs)
    return pred_row[0, :E].reshape(E, 1)


# ----------------------------------------------------------------------------- pure-JAX reference
def linkpred_reference(user_id, item_id, edge_ui, edge_label, p):
    Nu, Ni = user_id.shape[0], item_id.shape[0]
    xu = jnp.take(p["emb_user"], user_id, axis=0)
    xu = jnp.maximum(xu, 0.0) @ p["wu"] + p["bu"]
    xi = jnp.take(p["emb_item"], item_id, axis=0)
    xi = jnp.maximum(xi, 0.0) @ p["wi"] + p["bi"]

    e_u, e_i = edge_ui[0], edge_ui[1]

    def gat(name, x_src, x_dst, e_src, e_dst, n_dst):
        hs = x_src @ p[name + "_ws"] + p[name + "_bs"]
        hd = x_dst @ p[name + "_wd"] + p[name + "_bd"]
        z = hd[e_dst] + hs[e_src]
        z = jnp.where(z > 0.0, z, 0.2 * z)
        score = jnp.sum(z * p[name + "_att"], axis=-1)                         # (Eg,)
        smax = jax.ops.segment_max(score, e_dst, num_segments=n_dst)
        ex = jnp.exp(score - smax[e_dst])
        denom = jax.ops.segment_sum(ex, e_dst, num_segments=n_dst)
        alpha = ex / denom[e_dst]
        out = jax.ops.segment_sum(hs[e_src] * alpha[:, None], e_dst, num_segments=n_dst)
        return out + p[name + "_bo"]

    xi1 = jax.nn.relu(gat("c1_ui", xu, xi, e_u, e_i, Ni))
    xu1 = jax.nn.relu(gat("c1_iu", xi, xu, e_i, e_u, Nu))
    xi2 = gat("c2_ui", xu1, xi1, e_u, e_i, Ni)
    xu2 = gat("c2_iu", xi1, xu1, e_i, e_u, Nu)

    pu = xu2[edge_label[0]]
    pi = xi2[edge_label[1]]
    return jnp.sum(pu * p["wc_u"] + pi * p["wc_i"], axis=-1, keepdims=True) + p["bc"]


# ----------------------------------------------------------------------------- params
def init_params(key, num_user, num_item, H):
    ks = iter(jax.random.split(key, 64))
    w = lambda shape, s=0.2: jax.random.normal(next(ks), shape, jnp.float32) * s
    p = {}
    p["emb_user"] = w((num_user, H), 0.5)
    p["emb_item"] = w((num_item, H), 0.5)
    p["wu"], p["bu"] = w((H, H)), w((1, H))
    p["wi"], p["bi"] = w((H, H)), w((1, H))
    for name in ("c1_ui", "c1_iu", "c2_ui", "c2_iu"):
        p[name + "_ws"], p[name + "_wd"] = w((H, H)), w((H, H))     # lin_l (src), lin_r (dst)
        p[name + "_bs"], p[name + "_bd"] = w((1, H)), w((1, H))
        p[name + "_att"], p[name + "_bo"] = w((1, H)), w((1, H))
    p["wc_u"], p["wc_i"], p["bc"] = w((1, H)), w((1, H)), w((1, 1))
    return p


if __name__ == "__main__":
    num_user_total, num_item_total = 16, 32    # embedding table sizes
    Nu, Ni, H = 8, 16, 32                      # nodes in the minibatch, hidden_channels
    E_graph, E_label = 32, 16                  # message edges, supervision edges

    key = jax.random.PRNGKey(0)
    kp, k1, k2, k3, k4, k5 = jax.random.split(key, 6)
    params = init_params(kp, num_user_total, num_item_total, H)

    user_id = jax.random.randint(k1, (Nu,), 0, num_user_total, dtype=jnp.int32)
    item_id = jax.random.randint(k2, (Ni,), 0, num_item_total, dtype=jnp.int32)

    # unique (user, item) edges for ('user','rates','item'); reverse edges are the transpose
    pairs = jax.random.permutation(k3, Nu * Ni)[:E_graph]
    edge_ui = jnp.stack([pairs // Ni, pairs % Ni]).astype(jnp.int32)           # (2, E_graph)

    edge_label = jnp.stack([
        jax.random.randint(k4, (E_label,), 0, Nu, dtype=jnp.int32),
        jax.random.randint(k5, (E_label,), 0, Ni, dtype=jnp.int32),
    ])                                                                         # (2, E_label)

    out = jax.jit(linkpred_forward)(user_id, item_id, edge_ui, edge_label, params)
    out = jax.block_until_ready(out)

    ref = linkpred_reference(user_id, item_id, edge_ui, edge_label, params)
    assert out.shape == (E_label, 1)
    # bf16 MXU operands (recommended native path) vs f32 reference -> looser tolerance than
    # the earlier all-f32 version; softmax/mask math itself is kept in f32 in-kernel.
    np.testing.assert_allclose(np.asarray(out), np.asarray(ref), rtol=5e-2, atol=5e-2)
    print("KERNEL_OK")
</pallas_src>

<mosaic_0001>
module attributes {stable_mosaic.version = 11 : i64} {
  func.func @linkpred_kernel(%arg0: memref<8x32xbf16, #tpu.memory_space<vmem>>, %arg1: memref<16x32xbf16, #tpu.memory_space<vmem>>, %arg2: memref<16x8xbf16, #tpu.memory_space<vmem>>, %arg3: memref<8x16xbf16, #tpu.memory_space<vmem>>, %arg4: memref<8x128xbf16, #tpu.memory_space<vmem>>, %arg5: memref<16x128xbf16, #tpu.memory_space<vmem>>, %arg6: memref<32x32xbf16, #tpu.memory_space<vmem>>, %arg7: memref<1x32xf32, #tpu.memory_space<vmem>>, %arg8: memref<32x32xbf16, #tpu.memory_space<vmem>>, %arg9: memref<1x32xf32, #tpu.memory_space<vmem>>, %arg10: memref<32x64xbf16, #tpu.memory_space<vmem>>, %arg11: memref<32x64xbf16, #tpu.memory_space<vmem>>, %arg12: memref<32x64xbf16, #tpu.memory_space<vmem>>, %arg13: memref<32x64xbf16, #tpu.memory_space<vmem>>, %arg14: memref<4x32xf32, #tpu.memory_space<vmem>>, %arg15: memref<4x32xf32, #tpu.memory_space<vmem>>, %arg16: memref<4x32xf32, #tpu.memory_space<vmem>>, %arg17: memref<4x32xf32, #tpu.memory_space<vmem>>, %arg18: memref<1x32xbf16, #tpu.memory_space<vmem>>, %arg19: memref<1x32xbf16, #tpu.memory_space<vmem>>, %arg20: memref<1x1xf32, #tpu.memory_space<vmem>>, %arg21: memref<1x128xf32, #tpu.memory_space<vmem>>) attributes {dimension_semantics = [], scalar_prefetch = 0 : i64, scratch_operands = 0 : i64, tpu.core_type = #tpu.core_type<tc>} {
    %c0 = arith.constant 0 : index
    %c0_0 = arith.constant 0 : index
    %0 = vector.load %arg0[%c0, %c0_0] : memref<8x32xbf16, #tpu.memory_space<vmem>>, vector<8x32xbf16>
    %cst = arith.constant 0.000000e+00 : bf16
    %1 = vector.broadcast %cst : bf16 to vector<8x32xbf16>
    %2 = arith.maximumf %0, %1 : vector<8x32xbf16>
    %c0_1 = arith.constant 0 : index
    %c0_2 = arith.constant 0 : index
    %3 = vector.load %arg6[%c0_1, %c0_2] : memref<32x32xbf16, #tpu.memory_space<vmem>>, vector<32x32xbf16>
    %cst_3 = arith.constant dense<0.000000e+00> : vector<8x32xf32>
    %4 = tpu.matmul %2, %3, %cst_3 {dimension_numbers = #tpu.dot_dimension_numbers<[1], [0], [0], [1], [0, 0, 1, 1], [], []>} : vector<8x32xbf16>, vector<32x32xbf16>, vector<8x32xf32> -> vector<8x32xf32>
    %c0_4 = arith.constant 0 : index
    %c0_5 = arith.constant 0 : index
    %5 = vector.load %arg7[%c0_4, %c0_5] : memref<1x32xf32, #tpu.memory_space<vmem>>, vector<1x32xf32>
    %6 = vector.broadcast %5 : vector<1x32xf32> to vector<8x32xf32>
    %7 = arith.addf %4, %6 : vector<8x32xf32>
    %c0_6 = arith.constant 0 : index
    %c0_7 = arith.constant 0 : index
    %8 = vector.load %arg1[%c0_6, %c0_7] : memref<16x32xbf16, #tpu.memory_space<vmem>>, vector<16x32xbf16>
    %cst_8 = arith.constant 0.000000e+00 : bf16
    %9 = vector.broadcast %cst_8 : bf16 to vector<16x32xbf16>
    %10 = arith.maximumf %8, %9 : vector<16x32xbf16>
    %c0_9 = arith.constant 0 : index
    %c0_10 = arith.constant 0 : index
    %11 = vector.load %arg8[%c0_9, %c0_10] : memref<32x32xbf16, #tpu.memory_space<vmem>>, vector<32x32xbf16>
    %cst_11 = arith.constant dense<0.000000e+00> : vector<16x32xf32>
    %12 = tpu.matmul %10, %11, %cst_11 {dimension_numbers = #tpu.dot_dimension_numbers<[1], [0], [0], [1], [0, 0, 1, 1], [], []>} : vector<16x32xbf16>, vector<32x32xbf16>, vector<16x32xf32> -> vector<16x32xf32>
    %c0_12 = arith.constant 0 : index
    %c0_13 = arith.constant 0 : index
    %13 = vector.load %arg9[%c0_12, %c0_13] : memref<1x32xf32, #tpu.memory_space<vmem>>, vector<1x32xf32>
    %14 = vector.broadcast %13 : vector<1x32xf32> to vector<16x32xf32>
    %15 = arith.addf %12, %14 : vector<16x32xf32>
    %c0_14 = arith.constant 0 : index
    %c0_15 = arith.constant 0 : index
    %16 = vector.load %arg2[%c0_14, %c0_15] : memref<16x8xbf16, #tpu.memory_space<vmem>>, vector<16x8xbf16>
    %17 = arith.extf %16 : vector<16x8xbf16> to vector<16x8xf32>
    %c0_16 = arith.constant 0 : index
    %c0_17 = arith.constant 0 : index
    %18 = vector.load %arg3[%c0_16, %c0_17] : memref<8x16xbf16, #tpu.memory_space<vmem>>, vector<8x16xbf16>
    %19 = arith.extf %18 : vector<8x16xbf16> to vector<8x16xf32>
    %20 = arith.truncf %7 : vector<8x32xf32> to vector<8x32xbf16>
    %21 = arith.truncf %15 : vector<16x32xf32> to vector<16x32xbf16>
    %c0_18 = arith.constant 0 : index
    %c0_19 = arith.constant 0 : index
    %22 = vector.load %arg14[%c0_18, %c0_19] : memref<4x32xf32, #tpu.memory_space<vmem>>, vector<4x32xf32>
    %c0_20 = arith.constant 0 : index
    %c0_21 = arith.constant 0 : index
    %23 = vector.load %arg15[%c0_20, %c0_21] : memref<4x32xf32, #tpu.memory_space<vmem>>, vector<4x32xf32>
    %c0_22 = arith.constant 0 : index
    %c0_23 = arith.constant 0 : index
    %24 = vector.load %arg10[%c0_22, %c0_23] : memref<32x64xbf16, #tpu.memory_space<vmem>>, vector<32x64xbf16>
    %cst_24 = arith.constant dense<0.000000e+00> : vector<8x64xf32>
    %25 = tpu.matmul %20, %24, %cst_24 {dimension_numbers = #tpu.dot_dimension_numbers<[1], [0], [0], [1], [0, 0, 1, 1], [], []>} : vector<8x32xbf16>, vector<32x64xbf16>, vector<8x64xf32> -> vector<8x64xf32>
    %c0_25 = arith.constant 0 : index
    %c0_26 = arith.constant 0 : index
    %26 = vector.load %arg11[%c0_25, %c0_26] : memref<32x64xbf16, #tpu.memory_space<vmem>>, vector<32x64xbf16>
    %cst_27 = arith.constant dense<0.000000e+00> : vector<16x64xf32>
    %27 = tpu.matmul %21, %26, %cst_27 {dimension_numbers = #tpu.dot_dimension_numbers<[1], [0], [0], [1], [0, 0, 1, 1], [], []>} : vector<16x32xbf16>, vector<32x64xbf16>, vector<16x64xf32> -> vector<16x64xf32>
    %28 = vector.extract_strided_slice %25 {offsets = [0, 0], sizes = [8, 32], strides = [1, 1]} : vector<8x64xf32> to vector<8x32xf32>
    %29 = vector.extract_strided_slice %22 {offsets = [0, 0], sizes = [1, 32], strides = [1, 1]} : vector<4x32xf32> to vector<1x32xf32>
    %30 = vector.broadcast %29 : vector<1x32xf32> to vector<8x32xf32>
    %31 = arith.addf %28, %30 : vector<8x32xf32>
    %32 = vector.extract_strided_slice %27 {offsets = [0, 0], sizes = [16, 32], strides = [1, 1]} : vector<16x64xf32> to vector<16x32xf32>
    %33 = vector.extract_strided_slice %22 {offsets = [1, 0], sizes = [1, 32], strides = [1, 1]} : vector<4x32xf32> to vector<1x32xf32>
    %34 = vector.broadcast %33 : vector<1x32xf32> to vector<16x32xf32>
    %35 = arith.addf %32, %34 : vector<16x32xf32>
    %36 = vector.extract_strided_slice %22 {offsets = [2, 0], sizes = [1, 32], strides = [1, 1]} : vector<4x32xf32> to vector<1x32xf32>
    %37 = vector.extract_strided_slice %22 {offsets = [3, 0], sizes = [1, 32], strides = [1, 1]} : vector<4x32xf32> to vector<1x32xf32>
    %38 = vector.shape_cast %35 : vector<16x32xf32> to vector<16x1x32xf32>
    %39 = vector.shape_cast %31 : vector<8x32xf32> to vector<1x8x32xf32>
    %40 = vector.broadcast %38 : vector<16x1x32xf32> to vector<16x8x32xf32>
    %41 = vector.broadcast %39 : vector<1x8x32xf32> to vector<16x8x32xf32>
    %42 = arith.addf %40, %41 : vector<16x8x32xf32>
    %cst_28 = arith.constant 0.000000e+00 : f32
    %43 = vector.broadcast %cst_28 : f32 to vector<16x8x32xf32>
    %44 = arith.cmpf ogt, %42, %43 : vector<16x8x32xf32>
    %cst_29 = arith.constant 2.000000e-01 : f32
    %45 = vector.broadcast %cst_29 : f32 to vector<16x8x32xf32>
    %46 = arith.mulf %45, %42 : vector<16x8x32xf32>
    %47 = arith.select %44, %42, %46 : vector<16x8x32xi1>, vector<16x8x32xf32>
    %48 = vector.shape_cast %36 : vector<1x32xf32> to vector<1x1x32xf32>
    %49 = vector.broadcast %48 : vector<1x1x32xf32> to vector<16x8x32xf32>
    %50 = arith.mulf %47, %49 : vector<16x8x32xf32>
    %cst_30 = arith.constant dense<0.000000e+00> : vector<16x8xf32>
    %51 = vector.multi_reduction <add>, %50, %cst_30 [2] : vector<16x8x32xf32> to vector<16x8xf32>
    %cst_31 = arith.constant 0.000000e+00 : f32
    %52 = vector.broadcast %cst_31 : f32 to vector<16x8xf32>
    %53 = arith.cmpf ogt, %17, %52 : vector<16x8xf32>
    %cst_32 = arith.constant -1.000000e+30 : f32
    %54 = vector.broadcast %cst_32 : f32 to vector<16x8xf32>
    %55 = arith.select %53, %51, %54 : vector<16x8xi1>, vector<16x8xf32>
    %cst_33 = arith.constant dense<0xFF800000> : vector<16xf32>
    %56 = vector.multi_reduction <maximumf>, %55, %cst_33 [1] : vector<16x8xf32> to vector<16xf32>
    %57 = vector.shape_cast %56 : vector<16xf32> to vector<16x1xf32>
    %58 = vector.broadcast %57 : vector<16x1xf32> to vector<16x8xf32>
    %59 = arith.subf %55, %58 : vector<16x8xf32>
    %60 = math.exp %59 : vector<16x8xf32>
    %61 = arith.mulf %60, %17 : vector<16x8xf32>
    %cst_34 = arith.constant dense<0.000000e+00> : vector<16xf32>
    %62 = vector.multi_reduction <add>, %61, %cst_34 [1] : vector<16x8xf32> to vector<16xf32>
    %63 = vector.shape_cast %62 : vector<16xf32> to vector<16x1xf32>
    %cst_35 = arith.constant 0.000000e+00 : f32
    %64 = vector.broadcast %cst_35 : f32 to vector<16x1xf32>
    %65 = arith.cmpf ogt, %63, %64 : vector<16x1xf32>
    %cst_36 = arith.constant 1.000000e+00 : f32
    %66 = vector.broadcast %cst_36 : f32 to vector<16x1xf32>
    %67 = arith.select %65, %63, %66 : vector<16x1xi1>, vector<16x1xf32>
    %68 = tpu.reciprocal %67 {approx = true} : vector<16x1xf32> -> vector<16x1xf32>
    %69 = vector.broadcast %68 : vector<16x1xf32> to vector<16x8xf32>
    %70 = arith.mulf %61, %69 : vector<16x8xf32>
    %71 = arith.truncf %70 : vector<16x8xf32> to vector<16x8xbf16>
    %72 = arith.truncf %31 : vector<8x32xf32> to vector<8x32xbf16>
    %cst_37 = arith.constant dense<0.000000e+00> : vector<16x32xf32>
    %73 = tpu.matmul %71, %72, %cst_37 {dimension_numbers = #tpu.dot_dimension_numbers<[1], [0], [0], [1], [0, 0, 1, 1], [], []>} : vector<16x8xbf16>, vector<8x32xbf16>, vector<16x32xf32> -> vector<16x32xf32>
    %74 = vector.broadcast %37 : vector<1x32xf32> to vector<16x32xf32>
    %75 = arith.addf %73, %74 : vector<16x32xf32>
    %76 = vector.extract_strided_slice %27 {offsets = [0, 32], sizes = [16, 32], strides = [1, 1]} : vector<16x64xf32> to vector<16x32xf32>
    %77 = vector.extract_strided_slice %23 {offsets = [0, 0], sizes = [1, 32], strides = [1, 1]} : vector<4x32xf32> to vector<1x32xf32>
    %78 = vector.broadcast %77 : vector<1x32xf32> to vector<16x32xf32>
    %79 = arith.addf %76, %78 : vector<16x32xf32>
    %80 = vector.extract_strided_slice %25 {offsets = [0, 32], sizes = [8, 32], strides = [1, 1]} : vector<8x64xf32> to vector<8x32xf32>
    %81 = vector.extract_strided_slice %23 {offsets = [1, 0], sizes = [1, 32], strides = [1, 1]} : vector<4x32xf32> to vector<1x32xf32>
    %82 = vector.broadcast %81 : vector<1x32xf32> to vector<8x32xf32>
    %83 = arith.addf %80, %82 : vector<8x32xf32>
    %84 = vector.extract_strided_slice %23 {offsets = [2, 0], sizes = [1, 32], strides = [1, 1]} : vector<4x32xf32> to vector<1x32xf32>
    %85 = vector.extract_strided_slice %23 {offsets = [3, 0], sizes = [1, 32], strides = [1, 1]} : vector<4x32xf32> to vector<1x32xf32>
    %86 = vector.shape_cast %83 : vector<8x32xf32> to vector<8x1x32xf32>
    %87 = vector.shape_cast %79 : vector<16x32xf32> to vector<1x16x32xf32>
    %88 = vector.broadcast %86 : vector<8x1x32xf32> to vector<8x16x32xf32>
    %89 = vector.broadcast %87 : vector<1x16x32xf32> to vector<8x16x32xf32>
    %90 = arith.addf %88, %89 : vector<8x16x32xf32>
    %cst_38 = arith.constant 0.000000e+00 : f32
    %91 = vector.broadcast %cst_38 : f32 to vector<8x16x32xf32>
    %92 = arith.cmpf ogt, %90, %91 : vector<8x16x32xf32>
    %cst_39 = arith.constant 2.000000e-01 : f32
    %93 = vector.broadcast %cst_39 : f32 to vector<8x16x32xf32>
    %94 = arith.mulf %93, %90 : vector<8x16x32xf32>
    %95 = arith.select %92, %90, %94 : vector<8x16x32xi1>, vector<8x16x32xf32>
    %96 = vector.shape_cast %84 : vector<1x32xf32> to vector<1x1x32xf32>
    %97 = vector.broadcast %96 : vector<1x1x32xf32> to vector<8x16x32xf32>
    %98 = arith.mulf %95, %97 : vector<8x16x32xf32>
    %cst_40 = arith.constant dense<0.000000e+00> : vector<8x16xf32>
    %99 = vector.multi_reduction <add>, %98, %cst_40 [2] : vector<8x16x32xf32> to vector<8x16xf32>
    %cst_41 = arith.constant 0.000000e+00 : f32
    %100 = vector.broadcast %cst_41 : f32 to vector<8x16xf32>
    %101 = arith.cmpf ogt, %19, %100 : vector<8x16xf32>
    %cst_42 = arith.constant -1.000000e+30 : f32
    %102 = vector.broadcast %cst_42 : f32 to vector<8x16xf32>
    %103 = arith.select %101, %99, %102 : vector<8x16xi1>, vector<8x16xf32>
    %cst_43 = arith.constant dense<0xFF800000> : vector<8xf32>
    %104 = vector.multi_reduction <maximumf>, %103, %cst_43 [1] : vector<8x16xf32> to vector<8xf32>
    %105 = vector.shape_cast %104 : vector<8xf32> to vector<8x1xf32>
    %106 = vector.broadcast %105 : vector<8x1xf32> to vector<8x16xf32>
    %107 = arith.subf %103, %106 : vector<8x16xf32>
    %108 = math.exp %107 : vector<8x16xf32>
    %109 = arith.mulf %108, %19 : vector<8x16xf32>
    %cst_44 = arith.constant dense<0.000000e+00> : vector<8xf32>
    %110 = vector.multi_reduction <add>, %109, %cst_44 [1] : vector<8x16xf32> to vector<8xf32>
    %111 = vector.shape_cast %110 : vector<8xf32> to vector<8x1xf32>
    %cst_45 = arith.constant 0.000000e+00 : f32
    %112 = vector.broadcast %cst_45 : f32 to vector<8x1xf32>
    %113 = arith.cmpf ogt, %111, %112 : vector<8x1xf32>
    %cst_46 = arith.constant 1.000000e+00 : f32
    %114 = vector.broadcast %cst_46 : f32 to vector<8x1xf32>
    %115 = arith.select %113, %111, %114 : vector<8x1xi1>, vector<8x1xf32>
    %116 = tpu.reciprocal %115 {approx = true} : vector<8x1xf32> -> vector<8x1xf32>
    %117 = vector.broadcast %116 : vector<8x1xf32> to vector<8x16xf32>
    %118 = arith.mulf %109, %117 : vector<8x16xf32>
    %119 = arith.truncf %118 : vector<8x16xf32> to vector<8x16xbf16>
    %120 = arith.truncf %79 : vector<16x32xf32> to vector<16x32xbf16>
    %cst_47 = arith.constant dense<0.000000e+00> : vector<8x32xf32>
    %121 = tpu.matmul %119, %120, %cst_47 {dimension_numbers = #tpu.dot_dimension_numbers<[1], [0], [0], [1], [0, 0, 1, 1], [], []>} : vector<8x16xbf16>, vector<16x32xbf16>, vector<8x32xf32> -> vector<8x32xf32>
    %122 = vector.broadcast %85 : vector<1x32xf32> to vector<8x32xf32>
    %123 = arith.addf %121, %122 : vector<8x32xf32>
    %cst_48 = arith.constant 0.000000e+00 : f32
    %124 = vector.broadcast %cst_48 : f32 to vector<8x32xf32>
    %125 = arith.maximumf %123, %124 : vector<8x32xf32>
    %cst_49 = arith.constant 0.000000e+00 : f32
    %126 = vector.broadcast %cst_49 : f32 to vector<16x32xf32>
    %127 = arith.maximumf %75, %126 : vector<16x32xf32>
    %128 = arith.truncf %125 : vector<8x32xf32> to vector<8x32xbf16>
    %129 = arith.truncf %127 : vector<16x32xf32> to vector<16x32xbf16>
    %c0_50 = arith.constant 0 : index
    %c0_51 = arith.constant 0 : index
    %130 = vector.load %arg16[%c0_50, %c0_51] : memref<4x32xf32, #tpu.memory_space<vmem>>, vector<4x32xf32>
    %c0_52 = arith.constant 0 : index
    %c0_53 = arith.constant 0 : index
    %131 = vector.load %arg17[%c0_52, %c0_53] : memref<4x32xf32, #tpu.memory_space<vmem>>, vector<4x32xf32>
    %c0_54 = arith.constant 0 : index
    %c0_55 = arith.constant 0 : index
    %132 = vector.load %arg12[%c0_54, %c0_55] : memref<32x64xbf16, #tpu.memory_space<vmem>>, vector<32x64xbf16>
    %cst_56 = arith.constant dense<0.000000e+00> : vector<8x64xf32>
    %133 = tpu.matmul %128, %132, %cst_56 {dimension_numbers = #tpu.dot_dimension_numbers<[1], [0], [0], [1], [0, 0, 1, 1], [], []>} : vector<8x32xbf16>, vector<32x64xbf16>, vector<8x64xf32> -> vector<8x64xf32>
    %c0_57 = arith.constant 0 : index
    %c0_58 = arith.constant 0 : index
    %134 = vector.load %arg13[%c0_57, %c0_58] : memref<32x64xbf16, #tpu.memory_space<vmem>>, vector<32x64xbf16>
    %cst_59 = arith.constant dense<0.000000e+00> : vector<16x64xf32>
    %135 = tpu.matmul %129, %134, %cst_59 {dimension_numbers = #tpu.dot_dimension_numbers<[1], [0], [0], [1], [0, 0, 1, 1], [], []>} : vector<16x32xbf16>, vector<32x64xbf16>, vector<16x64xf32> -> vector<16x64xf32>
    %136 = vector.extract_strided_slice %133 {offsets = [0, 0], sizes = [8, 32], strides = [1, 1]} : vector<8x64xf32> to vector<8x32xf32>
    %137 = vector.extract_strided_slice %130 {offsets = [0, 0], sizes = [1, 32], strides = [1, 1]} : vector<4x32xf32> to vector<1x32xf32>
    %138 = vector.broadcast %137 : vector<1x32xf32> to vector<8x32xf32>
    %139 = arith.addf %136, %138 : vector<8x32xf32>
    %140 = vector.extract_strided_slice %135 {offsets = [0, 0], sizes = [16, 32], strides = [1, 1]} : vector<16x64xf32> to vector<16x32xf32>
    %141 = vector.extract_strided_slice %130 {offsets = [1, 0], sizes = [1, 32], strides = [1, 1]} : vector<4x32xf32> to vector<1x32xf32>
    %142 = vector.broadcast %141 : vector<1x32xf32> to vector<16x32xf32>
    %143 = arith.addf %140, %142 : vector<16x32xf32>
    %144 = vector.extract_strided_slice %130 {offsets = [2, 0], sizes = [1, 32], strides = [1, 1]} : vector<4x32xf32> to vector<1x32xf32>
    %145 = vector.extract_strided_slice %130 {offsets = [3, 0], sizes = [1, 32], strides = [1, 1]} : vector<4x32xf32> to vector<1x32xf32>
    %146 = vector.shape_cast %143 : vector<16x32xf32> to vector<16x1x32xf32>
    %147 = vector.shape_cast %139 : vector<8x32xf32> to vector<1x8x32xf32>
    %148 = vector.broadcast %146 : vector<16x1x32xf32> to vector<16x8x32xf32>
    %149 = vector.broadcast %147 : vector<1x8x32xf32> to vector<16x8x32xf32>
    %150 = arith.addf %148, %149 : vector<16x8x32xf32>
    %cst_60 = arith.constant 0.000000e+00 : f32
    %151 = vector.broadcast %cst_60 : f32 to vector<16x8x32xf32>
    %152 = arith.cmpf ogt, %150, %151 : vector<16x8x32xf32>
    %cst_61 = arith.constant 2.000000e-01 : f32
    %153 = vector.broadcast %cst_61 : f32 to vector<16x8x32xf32>
    %154 = arith.mulf %153, %150 : vector<16x8x32xf32>
    %155 = arith.select %152, %150, %154 : vector<16x8x32xi1>, vector<16x8x32xf32>
    %156 = vector.shape_cast %144 : vector<1x32xf32> to vector<1x1x32xf32>
    %157 = vector.broadcast %156 : vector<1x1x32xf32> to vector<16x8x32xf32>
    %158 = arith.mulf %155, %157 : vector<16x8x32xf32>
    %cst_62 = arith.constant dense<0.000000e+00> : vector<16x8xf32>
    %159 = vector.multi_reduction <add>, %158, %cst_62 [2] : vector<16x8x32xf32> to vector<16x8xf32>
    %cst_63 = arith.constant 0.000000e+00 : f32
    %160 = vector.broadcast %cst_63 : f32 to vector<16x8xf32>
    %161 = arith.cmpf ogt, %17, %160 : vector<16x8xf32>
    %cst_64 = arith.constant -1.000000e+30 : f32
    %162 = vector.broadcast %cst_64 : f32 to vector<16x8xf32>
    %163 = arith.select %161, %159, %162 : vector<16x8xi1>, vector<16x8xf32>
    %cst_65 = arith.constant dense<0xFF800000> : vector<16xf32>
    %164 = vector.multi_reduction <maximumf>, %163, %cst_65 [1] : vector<16x8xf32> to vector<16xf32>
    %165 = vector.shape_cast %164 : vector<16xf32> to vector<16x1xf32>
    %166 = vector.broadcast %165 : vector<16x1xf32> to vector<16x8xf32>
    %167 = arith.subf %163, %166 : vector<16x8xf32>
    %168 = math.exp %167 : vector<16x8xf32>
    %169 = arith.mulf %168, %17 : vector<16x8xf32>
    %cst_66 = arith.constant dense<0.000000e+00> : vector<16xf32>
    %170 = vector.multi_reduction <add>, %169, %cst_66 [1] : vector<16x8xf32> to vector<16xf32>
    %171 = vector.shape_cast %170 : vector<16xf32> to vector<16x1xf32>
    %cst_67 = arith.constant 0.000000e+00 : f32
    %172 = vector.broadcast %cst_67 : f32 to vector<16x1xf32>
    %173 = arith.cmpf ogt, %171, %172 : vector<16x1xf32>
    %cst_68 = arith.constant 1.000000e+00 : f32
    %174 = vector.broadcast %cst_68 : f32 to vector<16x1xf32>
    %175 = arith.select %173, %171, %174 : vector<16x1xi1>, vector<16x1xf32>
    %176 = tpu.reciprocal %175 {approx = true} : vector<16x1xf32> -> vector<16x1xf32>
    %177 = vector.broadcast %176 : vector<16x1xf32> to vector<16x8xf32>
    %178 = arith.mulf %169, %177 : vector<16x8xf32>
    %179 = arith.truncf %178 : vector<16x8xf32> to vector<16x8xbf16>
    %180 = arith.truncf %139 : vector<8x32xf32> to vector<8x32xbf16>
    %cst_69 = arith.constant dense<0.000000e+00> : vector<16x32xf32>
    %181 = tpu.matmul %179, %180, %cst_69 {dimension_numbers = #tpu.dot_dimension_numbers<[1], [0], [0], [1], [0, 0, 1, 1], [], []>} : vector<16x8xbf16>, vector<8x32xbf16>, vector<16x32xf32> -> vector<16x32xf32>
    %182 = vector.broadcast %145 : vector<1x32xf32> to vector<16x32xf32>
    %183 = arith.addf %181, %182 : vector<16x32xf32>
    %184 = vector.extract_strided_slice %135 {offsets = [0, 32], sizes = [16, 32], strides = [1, 1]} : vector<16x64xf32> to vector<16x32xf32>
    %185 = vector.extract_strided_slice %131 {offsets = [0, 0], sizes = [1, 32], strides = [1, 1]} : vector<4x32xf32> to vector<1x32xf32>
    %186 = vector.broadcast %185 : vector<1x32xf32> to vector<16x32xf32>
    %187 = arith.addf %184, %186 : vector<16x32xf32>
    %188 = vector.extract_strided_slice %133 {offsets = [0, 32], sizes = [8, 32], strides = [1, 1]} : vector<8x64xf32> to vector<8x32xf32>
    %189 = vector.extract_strided_slice %131 {offsets = [1, 0], sizes = [1, 32], strides = [1, 1]} : vector<4x32xf32> to vector<1x32xf32>
    %190 = vector.broadcast %189 : vector<1x32xf32> to vector<8x32xf32>
    %191 = arith.addf %188, %190 : vector<8x32xf32>
    %192 = vector.extract_strided_slice %131 {offsets = [2, 0], sizes = [1, 32], strides = [1, 1]} : vector<4x32xf32> to vector<1x32xf32>
    %193 = vector.extract_strided_slice %131 {offsets = [3, 0], sizes = [1, 32], strides = [1, 1]} : vector<4x32xf32> to vector<1x32xf32>
    %194 = vector.shape_cast %191 : vector<8x32xf32> to vector<8x1x32xf32>
    %195 = vector.shape_cast %187 : vector<16x32xf32> to vector<1x16x32xf32>
    %196 = vector.broadcast %194 : vector<8x1x32xf32> to vector<8x16x32xf32>
    %197 = vector.broadcast %195 : vector<1x16x32xf32> to vector<8x16x32xf32>
    %198 = arith.addf %196, %197 : vector<8x16x32xf32>
    %cst_70 = arith.constant 0.000000e+00 : f32
    %199 = vector.broadcast %cst_70 : f32 to vector<8x16x32xf32>
    %200 = arith.cmpf ogt, %198, %199 : vector<8x16x32xf32>
    %cst_71 = arith.constant 2.000000e-01 : f32
    %201 = vector.broadcast %cst_71 : f32 to vector<8x16x32xf32>
    %202 = arith.mulf %201, %198 : vector<8x16x32xf32>
    %203 = arith.select %200, %198, %202 : vector<8x16x32xi1>, vector<8x16x32xf32>
    %204 = vector.shape_cast %192 : vector<1x32xf32> to vector<1x1x32xf32>
    %205 = vector.broadcast %204 : vector<1x1x32xf32> to vector<8x16x32xf32>
    %206 = arith.mulf %203, %205 : vector<8x16x32xf32>
    %cst_72 = arith.constant dense<0.000000e+00> : vector<8x16xf32>
    %207 = vector.multi_reduction <add>, %206, %cst_72 [2] : vector<8x16x32xf32> to vector<8x16xf32>
    %cst_73 = arith.constant 0.000000e+00 : f32
    %208 = vector.broadcast %cst_73 : f32 to vector<8x16xf32>
    %209 = arith.cmpf ogt, %19, %208 : vector<8x16xf32>
    %cst_74 = arith.constant -1.000000e+30 : f32
    %210 = vector.broadcast %cst_74 : f32 to vector<8x16xf32>
    %211 = arith.select %209, %207, %210 : vector<8x16xi1>, vector<8x16xf32>
    %cst_75 = arith.constant dense<0xFF800000> : vector<8xf32>
    %212 = vector.multi_reduction <maximumf>, %211, %cst_75 [1] : vector<8x16xf32> to vector<8xf32>
    %213 = vector.shape_cast %212 : vector<8xf32> to vector<8x1xf32>
    %214 = vector.broadcast %213 : vector<8x1xf32> to vector<8x16xf32>
    %215 = arith.subf %211, %214 : vector<8x16xf32>
    %216 = math.exp %215 : vector<8x16xf32>
    %217 = arith.mulf %216, %19 : vector<8x16xf32>
    %cst_76 = arith.constant dense<0.000000e+00> : vector<8xf32>
    %218 = vector.multi_reduction <add>, %217, %cst_76 [1] : vector<8x16xf32> to vector<8xf32>
    %219 = vector.shape_cast %218 : vector<8xf32> to vector<8x1xf32>
    %cst_77 = arith.constant 0.000000e+00 : f32
    %220 = vector.broadcast %cst_77 : f32 to vector<8x1xf32>
    %221 = arith.cmpf ogt, %219, %220 : vector<8x1xf32>
    %cst_78 = arith.constant 1.000000e+00 : f32
    %222 = vector.broadcast %cst_78 : f32 to vector<8x1xf32>
    %223 = arith.select %221, %219, %222 : vector<8x1xi1>, vector<8x1xf32>
    %224 = tpu.reciprocal %223 {approx = true} : vector<8x1xf32> -> vector<8x1xf32>
    %225 = vector.broadcast %224 : vector<8x1xf32> to vector<8x16xf32>
    %226 = arith.mulf %217, %225 : vector<8x16xf32>
    %227 = arith.truncf %226 : vector<8x16xf32> to vector<8x16xbf16>
    %228 = arith.truncf %187 : vector<16x32xf32> to vector<16x32xbf16>
    %cst_79 = arith.constant dense<0.000000e+00> : vector<8x32xf32>
    %229 = tpu.matmul %227, %228, %cst_79 {dimension_numbers = #tpu.dot_dimension_numbers<[1], [0], [0], [1], [0, 0, 1, 1], [], []>} : vector<8x16xbf16>, vector<16x32xbf16>, vector<8x32xf32> -> vector<8x32xf32>
    %230 = vector.broadcast %193 : vector<1x32xf32> to vector<8x32xf32>
    %231 = arith.addf %229, %230 : vector<8x32xf32>
    %c0_80 = arith.constant 0 : index
    %c0_81 = arith.constant 0 : index
    %232 = vector.load %arg18[%c0_80, %c0_81] : memref<1x32xbf16, #tpu.memory_space<vmem>>, vector<1x32xbf16>
    %233 = arith.truncf %231 : vector<8x32xf32> to vector<8x32xbf16>
    %cst_82 = arith.constant dense<0.000000e+00> : vector<1x8xf32>
    %234 = tpu.matmul %232, %233, %cst_82 {dimension_numbers = #tpu.dot_dimension_numbers<[1], [1], [0], [0], [0, 0, 1, 0], [], []>} : vector<1x32xbf16>, vector<8x32xbf16>, vector<1x8xf32> -> vector<1x8xf32>
    %c0_83 = arith.constant 0 : index
    %c0_84 = arith.constant 0 : index
    %235 = vector.load %arg19[%c0_83, %c0_84] : memref<1x32xbf16, #tpu.memory_space<vmem>>, vector<1x32xbf16>
    %236 = arith.truncf %183 : vector<16x32xf32> to vector<16x32xbf16>
    %cst_85 = arith.constant dense<0.000000e+00> : vector<1x16xf32>
    %237 = tpu.matmul %235, %236, %cst_85 {dimension_numbers = #tpu.dot_dimension_numbers<[1], [1], [0], [0], [0, 0, 1, 0], [], []>} : vector<1x32xbf16>, vector<16x32xbf16>, vector<1x16xf32> -> vector<1x16xf32>
    %238 = arith.truncf %234 : vector<1x8xf32> to vector<1x8xbf16>
    %c0_86 = arith.constant 0 : index
    %c0_87 = arith.constant 0 : index
    %239 = vector.load %arg4[%c0_86, %c0_87] : memref<8x128xbf16, #tpu.memory_space<vmem>>, vector<8x128xbf16>
    %cst_88 = arith.constant dense<0.000000e+00> : vector<1x128xf32>
    %240 = tpu.matmul %238, %239, %cst_88 {dimension_numbers = #tpu.dot_dimension_numbers<[1], [0], [0], [1], [0, 0, 1, 1], [], []>} : vector<1x8xbf16>, vector<8x128xbf16>, vector<1x128xf32> -> vector<1x128xf32>
    %241 = arith.truncf %237 : vector<1x16xf32> to vector<1x16xbf16>
    %c0_89 = arith.constant 0 : index
    %c0_90 = arith.constant 0 : index
    %242 = vector.load %arg5[%c0_89, %c0_90] : memref<16x128xbf16, #tpu.memory_space<vmem>>, vector<16x128xbf16>
    %cst_91 = arith.constant dense<0.000000e+00> : vector<1x128xf32>
    %243 = tpu.matmul %241, %242, %cst_91 {dimension_numbers = #tpu.dot_dimension_numbers<[1], [0], [0], [1], [0, 0, 1, 1], [], []>} : vector<1x16xbf16>, vector<16x128xbf16>, vector<1x128xf32> -> vector<1x128xf32>
    %244 = arith.addf %240, %243 : vector<1x128xf32>
    %c0_92 = arith.constant 0 : index
    %c0_93 = arith.constant 0 : index
    %245 = vector.load %arg20[%c0_92, %c0_93] : memref<1x1xf32, #tpu.memory_space<vmem>>, vector<1x1xf32>
    %246 = vector.broadcast %245 : vector<1x1xf32> to vector<1x128xf32>
    %247 = arith.addf %244, %246 : vector<1x128xf32>
    %c0_94 = arith.constant 0 : index
    %c0_95 = arith.constant 0 : index
    %248 = vector.load %arg21[%c0_94, %c0_95] : memref<1x128xf32, #tpu.memory_space<vmem>>, vector<1x128xf32>
    tpu.vector_store %arg21[%c0_94, %c0_95], %247 {strides = array<i32>} : memref<1x128xf32, #tpu.memory_space<vmem>>, vector<1x128xf32>,
    return
  }
}

</mosaic_0001>

<llo_original>
// kernel: linkpred_forward.1
$region0: #{linkpred_forward.1}
  #allocation0 [shape = 'u32[]', space=smem, size = 0x4, offset = 0x4, fixed_abs, tag = 'smem constant byte address 0x4 - core index']
  #allocation1 [shape = 'u32[72,128]{1,0:T(1,128)}', space=vmem, size = 0x9000, scoped, tag = 'internal scratch']
  #allocation2 [shape = 'f32[1,1]{1,0:T(1,128)S(1)}', space=vmem, size = 0x200, scoped, tag = 'scoped memory for linkpred_forward.1']
  %s0 = inlined_call_operand.vmem [shape: bf16[8,32], index: 0, kind: input, shape index: {}]
  %s1 = inlined_call_operand.vmem [shape: bf16[16,32], index: 1, kind: input, shape index: {}]
  %s2 = inlined_call_operand.vmem [shape: bf16[16,8], index: 2, kind: input, shape index: {}]
  %s3 = inlined_call_operand.vmem [shape: bf16[8,16], index: 3, kind: input, shape index: {}]
  %s4 = inlined_call_operand.vmem [shape: bf16[8,128], index: 4, kind: input, shape index: {}]
  %s5 = inlined_call_operand.vmem [shape: bf16[16,128], index: 5, kind: input, shape index: {}]
  %s6 = inlined_call_operand.vmem [shape: bf16[32,32], index: 6, kind: input, shape index: {}]
  %s7 = inlined_call_operand.vmem [shape: f32[1,32], index: 7, kind: input, shape index: {}]
  %s8 = inlined_call_operand.vmem [shape: bf16[32,32], index: 8, kind: input, shape index: {}]
  %s9 = inlined_call_operand.vmem [shape: f32[1,32], index: 9, kind: input, shape index: {}]
  %s10 = inlined_call_operand.vmem [shape: bf16[32,64], index: 10, kind: input, shape index: {}]
  %s11 = inlined_call_operand.vmem [shape: bf16[32,64], index: 11, kind: input, shape index: {}]
  %s12 = inlined_call_operand.vmem [shape: bf16[32,64], index: 12, kind: input, shape index: {}]
  %s13 = inlined_call_operand.vmem [shape: bf16[32,64], index: 13, kind: input, shape index: {}]
  %s14 = inlined_call_operand.vmem [shape: f32[4,32], index: 14, kind: input, shape index: {}]
  %s15 = inlined_call_operand.vmem [shape: f32[4,32], index: 15, kind: input, shape index: {}]
  %s16 = inlined_call_operand.vmem [shape: f32[4,32], index: 16, kind: input, shape index: {}]
  %s17 = inlined_call_operand.vmem [shape: f32[4,32], index: 17, kind: input, shape index: {}]
  %s18 = inlined_call_operand.vmem [shape: bf16[1,32], index: 18, kind: input, shape index: {}]
  %s19 = inlined_call_operand.vmem [shape: bf16[1,32], index: 19, kind: input, shape index: {}]
  %s20 = inlined_call_operand.<no memory space> [shape: f32[1,1], index: 20, kind: input, shape index: {}]
  %s21 = inlined_call_operand.vmem [shape: f32[1,128], index: 21, kind: output, shape index: {}]
  %s22 = sld [smem:[#allocation0]]
  $region94: #{linkpred_forward.1} parent=0
    _
  %s24 = ssub.s32 1, %s22
  %s25 = scalar_select 0, %s24, %s22
  %v26 = vstv %s20
  %27 = vst [vmem:[#allocation2] sm:$0x1] %v26
  // Predicated region
  $region2: #{linkpred_forward.1} parent=0 // pred_check
    _
  $region3: #{linkpred_forward.1} parent=0 // pred_check_branch
    %29 = sbr.rel (0) target = $region5
  $region4: #{linkpred_forward.1} parent=0 // pred_region
    _
  $region5: #{linkpred_forward.1} parent=0 // pred_fallthru
    _
  // Predicated region
  $region6: #{linkpred_forward.1} parent=0 // pred_check
    _
  $region7: #{linkpred_forward.1} parent=0 // pred_check_branch
    %31 = sbr.rel (0) target = $region9
  $region8: #{linkpred_forward.1} parent=0 // pred_region
    _
  $region9: #{linkpred_forward.1} parent=0 // pred_fallthru
    _
  // Predicated region
  $region10: #{linkpred_forward.1} parent=0 // pred_check
    _
  $region11: #{linkpred_forward.1} parent=0 // pred_check_branch
    %33 = sbr.rel (0) target = $region13
  $region12: #{linkpred_forward.1} parent=0 // pred_region
    _
  $region13: #{linkpred_forward.1} parent=0 // pred_fallthru
    _
  // Predicated region
  $region14: #{linkpred_forward.1} parent=0 // pred_check
    _
  $region15: #{linkpred_forward.1} parent=0 // pred_check_branch
    %35 = sbr.rel (0) target = $region17
  $region16: #{linkpred_forward.1} parent=0 // pred_region
    _
  $region17: #{linkpred_forward.1} parent=0 // pred_fallthru
    _
  // Predicated region
  $region18: #{linkpred_forward.1} parent=0 // pred_check
    _
  $region19: #{linkpred_forward.1} parent=0 // pred_check_branch
    %37 = sbr.rel (0) target = $region21
  $region20: #{linkpred_forward.1} parent=0 // pred_region
    _
  $region21: #{linkpred_forward.1} parent=0 // pred_fallthru
    _
  // Predicated region
  $region22: #{linkpred_forward.1} parent=0 // pred_check
    _
  $region23: #{linkpred_forward.1} parent=0 // pred_check_branch
    %39 = sbr.rel (0) target = $region25
  $region24: #{linkpred_forward.1} parent=0 // pred_region
    _
  $region25: #{linkpred_forward.1} parent=0 // pred_fallthru
    _
  // Predicated region
  $region26: #{linkpred_forward.1} parent=0 // pred_check
    _
  $region27: #{linkpred_forward.1} parent=0 // pred_check_branch
    %41 = sbr.rel (0) target = $region29
  $region28: #{linkpred_forward.1} parent=0 // pred_region
    _
  $region29: #{linkpred_forward.1} parent=0 // pred_fallthru
    _
  // Predicated region
  $region30: #{linkpred_forward.1} parent=0 // pred_check
    _
  $region31: #{linkpred_forward.1} parent=0 // pred_check_branch
    %43 = sbr.rel (0) target = $region33
  $region32: #{linkpred_forward.1} parent=0 // pred_region
    _
  $region33: #{linkpred_forward.1} parent=0 // pred_fallthru
    _
  // Predicated region
  $region34: #{linkpred_forward.1} parent=0 // pred_check
    _
  $region35: #{linkpred_forward.1} parent=0 // pred_check_branch
    %45 = sbr.rel (0) target = $region37
  $region36: #{linkpred_forward.1} parent=0 // pred_region
    _
  $region37: #{linkpred_forward.1} parent=0 // pred_fallthru
    _
  // Predicated region
  $region38: #{linkpred_forward.1} parent=0 // pred_check
    _
  $region39: #{linkpred_forward.1} parent=0 // pred_check_branch
    %47 = sbr.rel (0) target = $region41
  $region40: #{linkpred_forward.1} parent=0 // pred_region
    _
  $region41: #{linkpred_forward.1} parent=0 // pred_fallthru
    _
  // Predicated region
  $region42: #{linkpred_forward.1} parent=0 // pred_check
    _
  $region43: #{linkpred_forward.1} parent=0 // pred_check_branch
    %49 = sbr.rel (0) target = $region45
  $region44: #{linkpred_forward.1} parent=0 // pred_region
    _
  $region45: #{linkpred_forward.1} parent=0 // pred_fallthru
    _
  // Predicated region
  $region46: #{linkpred_forward.1} parent=0 // pred_check
    _
  $region47: #{linkpred_forward.1} parent=0 // pred_check_branch
    %51 = sbr.rel (0) target = $region49
  $region48: #{linkpred_forward.1} parent=0 // pred_region
    _
  $region49: #{linkpred_forward.1} parent=0 // pred_fallthru
    _
  // Predicated region
  $region50: #{linkpred_forward.1} parent=0 // pred_check
    _
  $region51: #{linkpred_forward.1} parent=0 // pred_check_branch
    %53 = sbr.rel (0) target = $region53
  $region52: #{linkpred_forward.1} parent=0 // pred_region
    _
  $region53: #{linkpred_forward.1} parent=0 // pred_fallthru
    _
  // Predicated region
  $region54: #{linkpred_forward.1} parent=0 // pred_check
    _
  $region55: #{linkpred_forward.1} parent=0 // pred_check_branch
    %55 = sbr.rel (0) target = $region57
  $region56: #{linkpred_forward.1} parent=0 // pred_region
    _
  $region57: #{linkpred_forward.1} parent=0 // pred_fallthru
    _
  // Predicated region
  $region58: #{linkpred_forward.1} parent=0 // pred_check
    _
  $region59: #{linkpred_forward.1} parent=0 // pred_check_branch
    %57 = sbr.rel (0) target = $region61
  $region60: #{linkpred_forward.1} parent=0 // pred_region
    _
  $region61: #{linkpred_forward.1} parent=0 // pred_fallthru
    _
  // Predicated region
  $region62: #{linkpred_forward.1} parent=0 // pred_check
    _
  $region63: #{linkpred_forward.1} parent=0 // pred_check_branch
    %59 = sbr.rel (0) target = $region65
  $region64: #{linkpred_forward.1} parent=0 // pred_region
    _
  $region65: #{linkpred_forward.1} parent=0 // pred_fallthru
    _
  // Predicated region
  $region66: #{linkpred_forward.1} parent=0 // pred_check
    _
  $region67: #{linkpred_forward.1} parent=0 // pred_check_branch
    %61 = sbr.rel (0) target = $region69
  $region68: #{linkpred_forward.1} parent=0 // pred_region
    _
  $region69: #{linkpred_forward.1} parent=0 // pred_fallthru
    _
  // Predicated region
  $region70: #{linkpred_forward.1} parent=0 // pred_check
    _
  $region71: #{linkpred_forward.1} parent=0 // pred_check_branch
    %63 = sbr.rel (0) target = $region73
  $region72: #{linkpred_forward.1} parent=0 // pred_region
    _
  $region73: #{linkpred_forward.1} parent=0 // pred_fallthru
    _
  // Predicated region
  $region74: #{linkpred_forward.1} parent=0 // pred_check
    _
  $region75: #{linkpred_forward.1} parent=0 // pred_check_branch
    %65 = sbr.rel (0) target = $region77
  $region76: #{linkpred_forward.1} parent=0 // pred_region
    _
  $region77: #{linkpred_forward.1} parent=0 // pred_fallthru
    _
  // Predicated region
  $region78: #{linkpred_forward.1} parent=0 // pred_check
    _
  $region79: #{linkpred_forward.1} parent=0 // pred_check_branch
    %67 = sbr.rel (0) target = $region81
  $region80: #{linkpred_forward.1} parent=0 // pred_region
    _
  $region81: #{linkpred_forward.1} parent=0 // pred_fallthru
    _
  // Predicated region
  $region82: #{linkpred_forward.1} parent=0 // pred_check
    _
  $region83: #{linkpred_forward.1} parent=0 // pred_check_branch
    %69 = sbr.rel (0) target = $region85
  $region84: #{linkpred_forward.1} parent=0 // pred_region
    _
  $region85: #{linkpred_forward.1} parent=0 // pred_fallthru
    _
  %v71 = vld [vmem:[%s0] sm:$0xf]
  %v72 = vunpack.c.l.bf16 %v71
  %v73 = vmax.f32 %v72, 0.0
  %v74 = vpack.c.bf16 %v73, %v73
  %v75 = vld [vmem:[%s6] sm:$0xf]
  %v76 = vld [vmem:[%s6 + $0x4] sm:$0xf]
  %v77 = vld [vmem:[%s6 + $0x8] sm:$0xf]
  %v78 = vld [vmem:[%s6 + $0xc] sm:$0xf]
  %v79 = vld [vmem:[%s7] sm:$0x1]
  %v81 = vperm.slane %v79, 0
  %v87 = vunpack.c.l.b16 %v75
  %v88 = vunpack.c.l.b16 %v76
  %v89 = vunpack.c.l.b16 %v77
  %v90 = vunpack.c.l.b16 %v78
  %v91 = vpack.c.b16 %v88, %v87
  %v92 = vpack.c.b16 %v90, %v89
  %vm95 = vcmask 261120
  %v97 = vsel %vm95, %v74, 0
  %99 = vmatpush.bf16.msra.mxu0 0
  %100 = vmatpush.bf16.msra.mxu0 0
  %101 = vmatpush.bf16.msra.mxu0 0
  %102 = vmatpush.bf16.msra.mxu0 0
  %103 = vmatpush.bf16.msra.mxu0 0
  %104 = vmatpush.bf16.msra.mxu0 0
  %105 = vmatpush.bf16.msra.mxu0 %v92
  %106 = vmatpush.bf16.msra.mxu0 %v91
  %107 = vmatmul.bf16.gmra.mxu0 %v97
  %v108 = vpop.f32.mrf.mxu0
  %v109 = vadd.f32 %v81, %v108
  %v110 = vpop.f32.mrf.mxu0
  %111 = vdwg.mxu0
  %v112 = vld [vmem:[%s1] sm:$0xf]
  %v113 = vld [vmem:[%s1 + $0x4] sm:$0xf]
  %v114 = vunpack.c.l.bf16 %v112
  %v115 = vunpack.c.l.bf16 %v113
  %v116 = vmax.f32 %v114, 0.0
  %v117 = vmax.f32 %v115, 0.0
  %v118 = vpack.c.bf16 %v117, %v116
  %v119 = vld [vmem:[%s8] sm:$0xf]
  %v120 = vld [vmem:[%s8 + $0x4] sm:$0xf]
  %v121 = vld [vmem:[%s8 + $0x8] sm:$0xf]
  %v122 = vld [vmem:[%s8 + $0xc] sm:$0xf]
  %v123 = vld [vmem:[%s9] sm:$0x1]
  %v125 = vperm.slane %v123, 0
  %v131 = vunpack.c.l.b16 %v119
  %v132 = vunpack.c.l.b16 %v120
  %v133 = vunpack.c.l.b16 %v121
  %v134 = vunpack.c.l.b16 %v122
  %v135 = vpack.c.b16 %v132, %v131
  %v136 = vpack.c.b16 %v134, %v133
  %v140 = vsel %vm95, %v118, 0
  %142 = vmatpush.bf16.msra.mxu0 0
  %143 = vmatpush.bf16.msra.mxu0 0
  %144 = vmatpush.bf16.msra.mxu0 0
  %145 = vmatpush.bf16.msra.mxu0 0
  %146 = vmatpush.bf16.msra.mxu0 0
  %147 = vmatpush.bf16.msra.mxu0 0
  %148 = vmatpush.bf16.msra.mxu0 %v136
  %149 = vmatpush.bf16.msra.mxu0 %v135
  %150 = vmatmul.bf16.gmra.mxu0 %v140
  %v151 = vpop.f32.mrf.mxu0
  %v152 = vadd.f32 %v125, %v151
  %v153 = vpop.f32.mrf.mxu0
  %v154 = vadd.f32 %v125, %v153
  %155 = vdwg.mxu0
  %v156 = vld [vmem:[%s2] sm:$0xf]
  %v157 = vld [vmem:[%s2 + $0x4] sm:$0xf]
  %v158 = vunpack.c.l.bf16 %v156
  %v159 = vunpack.c.l.bf16 %v157
  %v160 = vld [vmem:[%s3] sm:$0xf]
  %v161 = vunpack.c.l.bf16 %v160
  %v162 = vpack.c.bf16 %v109, %v109
  %v163 = vpack.c.bf16 %v154, %v152
  %v164 = vld [vmem:[%s14] sm:$0xf]
  %v165 = vld [vmem:[%s15] sm:$0xf]
  %v166 = vld [vmem:[%s10] sm:$0xf]
  %v167 = vld [vmem:[%s10 + $0x4] sm:$0xf]
  %v168 = vld [vmem:[%s10 + $0x8] sm:$0xf]
  %v169 = vld [vmem:[%s10 + $0xc] sm:$0xf]
  %v174 = vunpack.c.l.b16 %v166
  %v175 = vunpack.c.l.b16 %v167
  %v176 = vunpack.c.l.b16 %v168
  %v177 = vunpack.c.l.b16 %v169
  %v178 = vpack.c.b16 %v175, %v174
  %v179 = vpack.c.b16 %v177, %v176
  %v183 = vsel %vm95, %v162, 0
  %185 = vmatpush.bf16.msra.mxu0 0
  %186 = vmatpush.bf16.msra.mxu0 0
  %187 = vmatpush.bf16.msra.mxu0 0
  %188 = vmatpush.bf16.msra.mxu0 0
  %189 = vmatpush.bf16.msra.mxu0 0
  %190 = vmatpush.bf16.msra.mxu0 0
  %191 = vmatpush.bf16.msra.mxu0 %v179
  %192 = vmatpush.bf16.msra.mxu0 %v178
  %193 = vmatmul.bf16.gmra.mxu0 %v183
  %v194 = vpop.f32.mrf.mxu0
  %v195 = vadd.f32 0.0, %v194
  %v196 = vpop.f32.mrf.mxu0
  %197 = vdwg.mxu0
  %v198 = vld [vmem:[%s11] sm:$0xf]
  %v199 = vld [vmem:[%s11 + $0x4] sm:$0xf]
  %v200 = vld [vmem:[%s11 + $0x8] sm:$0xf]
  %v201 = vld [vmem:[%s11 + $0xc] sm:$0xf]
  %v206 = vunpack.c.l.b16 %v198
  %v207 = vunpack.c.l.b16 %v199
  %v208 = vunpack.c.l.b16 %v200
  %v209 = vunpack.c.l.b16 %v201
  %v210 = vpack.c.b16 %v207, %v206
  %v211 = vpack.c.b16 %v209, %v208
  %v215 = vsel %vm95, %v163, 0
  %217 = vmatpush.bf16.msra.mxu0 0
  %218 = vmatpush.bf16.msra.mxu0 0
  %219 = vmatpush.bf16.msra.mxu0 0
  %220 = vmatpush.bf16.msra.mxu0 0
  %221 = vmatpush.bf16.msra.mxu0 0
  %222 = vmatpush.bf16.msra.mxu0 0
  %223 = vmatpush.bf16.msra.mxu0 %v211
  %224 = vmatpush.bf16.msra.mxu0 %v210
  %225 = vmatmul.bf16.gmra.mxu0 %v215
  %v226 = vpop.f32.mrf.mxu0
  %v227 = vadd.f32 0.0, %v226
  %v228 = vpop.f32.mrf.mxu0
  %v229 = vadd.f32 0.0, %v228
  %230 = vdwg.mxu0
  %v231 = vperm.slane %v164, 0
  %v232 = vadd.f32 %v195, %v231
  %v233 = vperm.slane %v164, 1
  %v234 = vadd.f32 %v227, %v233
  %v235 = vadd.f32 %v229, %v233
  %v238 = vrot.slane %v234, 1
  %v239 = vrot.slane %v234, 2
  %v240 = vrot.slane %v234, 3
  %v241 = vrot.slane %v234, 4
  %v242 = vrot.slane %v234, 5
  %v243 = vrot.slane %v234, 6
  %v244 = vrot.slane %v234, 7
  %v245 = vrot.slane %v235, 1
  %v246 = vrot.slane %v235, 2
  %v247 = vrot.slane %v235, 3
  %v248 = vrot.slane %v235, 4
  %v249 = vrot.slane %v235, 5
  %v250 = vrot.slane %v235, 6
  %v251 = vrot.slane %v235, 7
  %v252 = vperm.slane %v234, 0
  %v253 = vperm.slane %v238, 0
  %v254 = vperm.slane %v239, 0
  %v255 = vperm.slane %v240, 0
  %v256 = vperm.slane %v241, 0
  %v257 = vperm.slane %v242, 0
  %v258 = vperm.slane %v243, 0
  %v259 = vperm.slane %v244, 0
  %v260 = vperm.slane %v235, 0
  %v261 = vperm.slane %v245, 0
  %v262 = vperm.slane %v246, 0
  %v263 = vperm.slane %v247, 0
  %v264 = vperm.slane %v248, 0
  %v265 = vperm.slane %v249, 0
  %v266 = vperm.slane %v250, 0
  %v267 = vperm.slane %v251, 0
  %v284 = vadd.f32 %v252, %v232
  %v285 = vadd.f32 %v253, %v232
  %v286 = vadd.f32 %v254, %v232
  %v287 = vadd.f32 %v255, %v232
  %v288 = vadd.f32 %v256, %v232
  %v289 = vadd.f32 %v257, %v232
  %v290 = vadd.f32 %v258, %v232
  %v291 = vadd.f32 %v259, %v232
  %v292 = vadd.f32 %v260, %v232
  %v293 = vadd.f32 %v261, %v232
  %v294 = vadd.f32 %v262, %v232
  %v295 = vadd.f32 %v263, %v232
  %v296 = vadd.f32 %v264, %v232
  %v297 = vadd.f32 %v265, %v232
  %v298 = vadd.f32 %v266, %v232
  %v299 = vadd.f32 %v267, %v232
  %vm300 = vcmp.gt.f32.partialorder %v284, 0.0
  %vm301 = vcmp.gt.f32.partialorder %v285, 0.0
  %vm302 = vcmp.gt.f32.partialorder %v286, 0.0
  %vm303 = vcmp.gt.f32.partialorder %v287, 0.0
  %vm304 = vcmp.gt.f32.partialorder %v288, 0.0
  %vm305 = vcmp.gt.f32.partialorder %v289, 0.0
  %vm306 = vcmp.gt.f32.partialorder %v290, 0.0
  %vm307 = vcmp.gt.f32.partialorder %v291, 0.0
  %vm308 = vcmp.gt.f32.partialorder %v292, 0.0
  %vm309 = vcmp.gt.f32.partialorder %v293, 0.0
  %vm310 = vcmp.gt.f32.partialorder %v294, 0.0
  %vm311 = vcmp.gt.f32.partialorder %v295, 0.0
  %vm312 = vcmp.gt.f32.partialorder %v296, 0.0
  %vm313 = vcmp.gt.f32.partialorder %v297, 0.0
  %vm314 = vcmp.gt.f32.partialorder %v298, 0.0
  %vm315 = vcmp.gt.f32.partialorder %v299, 0.0
  %v316 = vmul.f32 %v284, 0.2
  %v317 = vmul.f32 %v285, 0.2
  %v318 = vmul.f32 %v286, 0.2
  %v319 = vmul.f32 %v287, 0.2
  %v320 = vmul.f32 %v288, 0.2
  %v321 = vmul.f32 %v289, 0.2
  %v322 = vmul.f32 %v290, 0.2
  %v323 = vmul.f32 %v291, 0.2
  %v324 = vmul.f32 %v292, 0.2
  %v325 = vmul.f32 %v293, 0.2
  %v326 = vmul.f32 %v294, 0.2
  %v327 = vmul.f32 %v295, 0.2
  %v328 = vmul.f32 %v296, 0.2
  %v329 = vmul.f32 %v297, 0.2
  %v330 = vmul.f32 %v298, 0.2
  %v331 = vmul.f32 %v299, 0.2
  %v332 = vsel %vm300, %v284, %v316
  %v333 = vsel %vm301, %v285, %v317
  %v334 = vsel %vm302, %v286, %v318
  %v335 = vsel %vm303, %v287, %v319
  %v336 = vsel %vm304, %v288, %v320
  %v337 = vsel %vm305, %v289, %v321
  %v338 = vsel %vm306, %v290, %v322
  %v339 = vsel %vm307, %v291, %v323
  %v340 = vsel %vm308, %v292, %v324
  %v341 = vsel %vm309, %v293, %v325
  %v342 = vsel %vm310, %v294, %v326
  %v343 = vsel %vm311, %v295, %v327
  %v344 = vsel %vm312, %v296, %v328
  %v345 = vsel %vm313, %v297, %v329
  %v346 = vsel %vm314, %v298, %v330
  %v347 = vsel %vm315, %v299, %v331
  %v348 = vperm.slane %v164, 2
  %v349 = vmul.f32 %v332, %v348
  %v350 = vmul.f32 %v333, %v348
  %v351 = vmul.f32 %v334, %v348
  %v352 = vmul.f32 %v335, %v348
  %v353 = vmul.f32 %v336, %v348
  %v354 = vmul.f32 %v337, %v348
  %v355 = vmul.f32 %v338, %v348
  %v356 = vmul.f32 %v339, %v348
  %v357 = vmul.f32 %v340, %v348
  %v358 = vmul.f32 %v341, %v348
  %v359 = vmul.f32 %v342, %v348
  %v360 = vmul.f32 %v343, %v348
  %v361 = vmul.f32 %v344, %v348
  %v362 = vmul.f32 %v345, %v348
  %v363 = vmul.f32 %v346, %v348
  %v364 = vmul.f32 %v347, %v348
  %v365 = vsel %vm95, %v349, 0.0
  %366 = vadd.xlane.f32.xlu0 %v365
  %v367 = vpop.xlane.xlu0 %366
  %v368 = vsel %vm95, %v350, 0.0
  %369 = vadd.xlane.f32.xlu0 %v368
  %v370 = vpop.xlane.xlu0 %369
  %v371 = vsel %vm95, %v351, 0.0
  %372 = vadd.xlane.f32.xlu0 %v371
  %v373 = vpop.xlane.xlu0 %372
  %v374 = vsel %vm95, %v352, 0.0
  %375 = vadd.xlane.f32.xlu0 %v374
  %v376 = vpop.xlane.xlu0 %375
  %v377 = vsel %vm95, %v353, 0.0
  %378 = vadd.xlane.f32.xlu0 %v377
  %v379 = vpop.xlane.xlu0 %378
  %v380 = vsel %vm95, %v354, 0.0
  %381 = vadd.xlane.f32.xlu0 %v380
  %v382 = vpop.xlane.xlu0 %381
  %v383 = vsel %vm95, %v355, 0.0
  %384 = vadd.xlane.f32.xlu0 %v383
  %v385 = vpop.xlane.xlu0 %384
  %v386 = vsel %vm95, %v356, 0.0
  %387 = vadd.xlane.f32.xlu0 %v386
  %v388 = vpop.xlane.xlu0 %387
  %v389 = vsel %vm95, %v357, 0.0
  %390 = vadd.xlane.f32.xlu0 %v389
  %v391 = vpop.xlane.xlu0 %390
  %v392 = vsel %vm95, %v358, 0.0
  %393 = vadd.xlane.f32.xlu0 %v392
  %v394 = vpop.xlane.xlu0 %393
  %v395 = vsel %vm95, %v359, 0.0
  %396 = vadd.xlane.f32.xlu0 %v395
  %v397 = vpop.xlane.xlu0 %396
  %v398 = vsel %vm95, %v360, 0.0
  %399 = vadd.xlane.f32.xlu0 %v398
  %v400 = vpop.xlane.xlu0 %399
  %v401 = vsel %vm95, %v361, 0.0
  %402 = vadd.xlane.f32.xlu0 %v401
  %v403 = vpop.xlane.xlu0 %402
  %v404 = vsel %vm95, %v362, 0.0
  %405 = vadd.xlane.f32.xlu0 %v404
  %v406 = vpop.xlane.xlu0 %405
  %v407 = vsel %vm95, %v363, 0.0
  %408 = vadd.xlane.f32.xlu0 %v407
  %v409 = vpop.xlane.xlu0 %408
  %v410 = vsel %vm95, %v364, 0.0
  %411 = vadd.xlane.f32.xlu0 %v410
  %v412 = vpop.xlane.xlu0 %411
  %vm413 = vcmp.gt.f32.partialorder %v158, 0.0
  %vm414 = vcmp.gt.f32.partialorder %v159, 0.0
  %v431 = vlaneseq
  %v432 = vand.u32 %v431, 127
  %v433 = vperm.slane %v367, %v432
  %v434 = vperm.slane %v370, %v432
  %v435 = vperm.slane %v373, %v432
  %v436 = vperm.slane %v376, %v432
  %v437 = vperm.slane %v379, %v432
  %v438 = vperm.slane %v382, %v432
  %v439 = vperm.slane %v385, %v432
  %v440 = vperm.slane %v388, %v432
  %v441 = vperm.slane %v391, %v432
  %v442 = vperm.slane %v394, %v432
  %v443 = vperm.slane %v397, %v432
  %v444 = vperm.slane %v400, %v432
  %v445 = vperm.slane %v403, %v432
  %v446 = vperm.slane %v406, %v432
  %v447 = vperm.slane %v409, %v432
  %v448 = vperm.slane %v412, %v432
  %vm449 = vcmask 1041409
  %v450 = vsel %vm449, %v434, %v433
  %vm451 = vcmask 1042434
  %v452 = vsel %vm451, %v435, %v450
  %vm453 = vcmask 1043459
  %v454 = vsel %vm453, %v436, %v452
  %vm455 = vcmask 1044484
  %v456 = vsel %vm455, %v437, %v454
  %vm457 = vcmask 1045509
  %v458 = vsel %vm457, %v438, %v456
  %vm459 = vcmask 1046534
  %v460 = vsel %vm459, %v439, %v458
  %vm461 = vcmask 1047559
  %v462 = vsel %vm461, %v440, %v460
  %v463 = vsel %vm449, %v442, %v441
  %v464 = vsel %vm451, %v443, %v463
  %v465 = vsel %vm453, %v444, %v464
  %v466 = vsel %vm455, %v445, %v465
  %v467 = vsel %vm457, %v446, %v466
  %v468 = vsel %vm459, %v447, %v467
  %v469 = vsel %vm461, %v448, %v468
  %v472 = vsel %vm413, %v462, -1e+30
  %v473 = vsel %vm414, %v469, -1e+30
  %vm474 = vcmask 64512
  %v475 = vsel %vm474, %v472, -inf
  %476 = vmax.xlane.f32.xlu0 %v475
  %v477 = vpop.xlane.xlu0 %476
  %v478 = vsel %vm474, %v473, -inf
  %479 = vmax.xlane.f32.xlu0 %v478
  %v480 = vpop.xlane.xlu0 %479
  %v481 = vsub.f32 %v472, %v477
  %v482 = vsub.f32 %v473, %v480
  %v483 = vmul.f32 %v481, 1.442695
  %v484 = vpow.pop %v483
  %v485 = vmul.f32 %v482, 1.442695
  %v486 = vpow.pop %v485
  %v487 = vmul.f32 %v484, %v158
  %v488 = vmul.f32 %v486, %v159
  %v489 = vsel %vm474, %v487, 0.0
  %490 = vadd.xlane.f32.xlu0 %v489
  %v491 = vpop.xlane.xlu0 %490
  %v492 = vsel %vm474, %v488, 0.0
  %493 = vadd.xlane.f32.xlu0 %v492
  %v494 = vpop.xlane.xlu0 %493
  %vm495 = vcmp.gt.f32.partialorder %v491, 0.0
  %vm496 = vcmp.gt.f32.partialorder %v494, 0.0
  %v497 = vsel %vm495, %v491, 1.0
  %v498 = vsel %vm496, %v494, 1.0
  %v499 = vrcp.pop %v497
  %v500 = vrcp.pop %v498
  %v501 = vmul.f32 %v487, %v499
  %v502 = vmul.f32 %v488, %v500
  %v503 = vpack.c.bf16 %v502, %v501
  %v504 = vpack.c.bf16 %v232, %v232
  %v505 = vperm.slane %v164, 3
  %v507 = vsel %vm474, %v503, 0
  %vm509 = vcmask 1043456
  %v511 = vsel %vm509, %v504, 0
  %513 = vmatpush.bf16.msra.mxu0 0
  %514 = vmatpush.bf16.msra.mxu0 0
  %515 = vmatpush.bf16.msra.mxu0 0
  %516 = vmatpush.bf16.msra.mxu0 0
  %517 = vmatpush.bf16.msra.mxu0 0
  %518 = vmatpush.bf16.msra.mxu0 0
  %519 = vmatpush.bf16.msra.mxu0 0
  %520 = vmatpush.bf16.msra.mxu0 %v511
  %521 = vmatmul.bf16.gmra.mxu0 %v507
  %v522 = vpop.f32.mrf.mxu0
  %v523 = vadd.f32 %v505, %v522
  %v524 = vpop.f32.mrf.mxu0
  %v525 = vadd.f32 %v505, %v524
  %526 = vdwg.mxu0
  %v527 = vperm.slane %v165, 0
  %529 = vrot.lane.b32.xlu0 %v527, 32
  %v530 = vpop.permute.xlu0 %529
  %v532 = vadd.f32 %v227, %v530
  %v533 = vadd.f32 %v229, %v530
  %v534 = vperm.slane %v165, 1
  %536 = vrot.lane.b32.xlu0 %v534, 32
  %v537 = vpop.permute.xlu0 %536
  %v539 = vadd.f32 %v195, %v537
  %v541 = vrot.slane %v539, 1
  %v542 = vrot.slane %v539, 2
  %v543 = vrot.slane %v539, 3
  %v544 = vrot.slane %v539, 4
  %v545 = vrot.slane %v539, 5
  %v546 = vrot.slane %v539, 6
  %v547 = vrot.slane %v539, 7
  %v548 = vperm.slane %v539, 0
  %v549 = vperm.slane %v541, 0
  %v550 = vperm.slane %v542, 0
  %v551 = vperm.slane %v543, 0
  %v552 = vperm.slane %v544, 0
  %v553 = vperm.slane %v545, 0
  %v554 = vperm.slane %v546, 0
  %v555 = vperm.slane %v547, 0
  %v564 = vadd.f32 %v548, %v532
  %v565 = vadd.f32 %v548, %v533
  %v566 = vadd.f32 %v549, %v532
  %v567 = vadd.f32 %v549, %v533
  %v568 = vadd.f32 %v550, %v532
  %v569 = vadd.f32 %v550, %v533
  %v570 = vadd.f32 %v551, %v532
  %v571 = vadd.f32 %v551, %v533
  %v572 = vadd.f32 %v552, %v532
  %v573 = vadd.f32 %v552, %v533
  %v574 = vadd.f32 %v553, %v532
  %v575 = vadd.f32 %v553, %v533
  %v576 = vadd.f32 %v554, %v532
  %v577 = vadd.f32 %v554, %v533
  %v578 = vadd.f32 %v555, %v532
  %v579 = vadd.f32 %v555, %v533
  %vm580 = vcmp.gt.f32.partialorder %v564, 0.0
  %vm581 = vcmp.gt.f32.partialorder %v565, 0.0
  %vm582 = vcmp.gt.f32.partialorder %v566, 0.0
  %vm583 = vcmp.gt.f32.partialorder %v567, 0.0
  %vm584 = vcmp.gt.f32.partialorder %v568, 0.0
  %vm585 = vcmp.gt.f32.partialorder %v569, 0.0
  %vm586 = vcmp.gt.f32.partialorder %v570, 0.0
  %vm587 = vcmp.gt.f32.partialorder %v571, 0.0
  %vm588 = vcmp.gt.f32.partialorder %v572, 0.0
  %vm589 = vcmp.gt.f32.partialorder %v573, 0.0
  %vm590 = vcmp.gt.f32.partialorder %v574, 0.0
  %vm591 = vcmp.gt.f32.partialorder %v575, 0.0
  %vm592 = vcmp.gt.f32.partialorder %v576, 0.0
  %vm593 = vcmp.gt.f32.partialorder %v577, 0.0
  %vm594 = vcmp.gt.f32.partialorder %v578, 0.0
  %vm595 = vcmp.gt.f32.partialorder %v579, 0.0
  %v596 = vmul.f32 %v564, 0.2
  %v597 = vmul.f32 %v565, 0.2
  %v598 = vmul.f32 %v566, 0.2
  %v599 = vmul.f32 %v567, 0.2
  %v600 = vmul.f32 %v568, 0.2
  %v601 = vmul.f32 %v569, 0.2
  %v602 = vmul.f32 %v570, 0.2
  %v603 = vmul.f32 %v571, 0.2
  %v604 = vmul.f32 %v572, 0.2
  %v605 = vmul.f32 %v573, 0.2
  %v606 = vmul.f32 %v574, 0.2
  %v607 = vmul.f32 %v575, 0.2
  %v608 = vmul.f32 %v576, 0.2
  %v609 = vmul.f32 %v577, 0.2
  %v610 = vmul.f32 %v578, 0.2
  %v611 = vmul.f32 %v579, 0.2
  %v612 = vsel %vm580, %v564, %v596
  %v613 = vsel %vm581, %v565, %v597
  %v614 = vsel %vm582, %v566, %v598
  %v615 = vsel %vm583, %v567, %v599
  %v616 = vsel %vm584, %v568, %v600
  %v617 = vsel %vm585, %v569, %v601
  %v618 = vsel %vm586, %v570, %v602
  %v619 = vsel %vm587, %v571, %v603
  %v620 = vsel %vm588, %v572, %v604
  %v621 = vsel %vm589, %v573, %v605
  %v622 = vsel %vm590, %v574, %v606
  %v623 = vsel %vm591, %v575, %v607
  %v624 = vsel %vm592, %v576, %v608
  %v625 = vsel %vm593, %v577, %v609
  %v626 = vsel %vm594, %v578, %v610
  %v627 = vsel %vm595, %v579, %v611
  %v628 = vperm.slane %v165, 2
  %630 = vrot.lane.b32.xlu0 %v628, 32
  %v631 = vpop.permute.xlu0 %630
  %v633 = vmul.f32 %v612, %v631
  %v634 = vmul.f32 %v613, %v631
  %v635 = vmul.f32 %v614, %v631
  %v636 = vmul.f32 %v615, %v631
  %v637 = vmul.f32 %v616, %v631
  %v638 = vmul.f32 %v617, %v631
  %v639 = vmul.f32 %v618, %v631
  %v640 = vmul.f32 %v619, %v631
  %v641 = vmul.f32 %v620, %v631
  %v642 = vmul.f32 %v621, %v631
  %v643 = vmul.f32 %v622, %v631
  %v644 = vmul.f32 %v623, %v631
  %v645 = vmul.f32 %v624, %v631
  %v646 = vmul.f32 %v625, %v631
  %v647 = vmul.f32 %v626, %v631
  %v648 = vmul.f32 %v627, %v631
  %665 = vrot.lane.b32.xlu0 %v633, 96
  %v666 = vpop.permute.xlu0 %665
  %667 = vrot.lane.b32.xlu0 %v634, 96
  %v668 = vpop.permute.xlu0 %667
  %669 = vrot.lane.b32.xlu0 %v635, 96
  %v670 = vpop.permute.xlu0 %669
  %671 = vrot.lane.b32.xlu0 %v636, 96
  %v672 = vpop.permute.xlu0 %671
  %673 = vrot.lane.b32.xlu0 %v637, 96
  %v674 = vpop.permute.xlu0 %673
  %675 = vrot.lane.b32.xlu0 %v638, 96
  %v676 = vpop.permute.xlu0 %675
  %677 = vrot.lane.b32.xlu0 %v639, 96
  %v678 = vpop.permute.xlu0 %677
  %679 = vrot.lane.b32.xlu0 %v640, 96
  %v680 = vpop.permute.xlu0 %679
  %681 = vrot.lane.b32.xlu0 %v641, 96
  %v682 = vpop.permute.xlu0 %681
  %683 = vrot.lane.b32.xlu0 %v642, 96
  %v684 = vpop.permute.xlu0 %683
  %685 = vrot.lane.b32.xlu0 %v643, 96
  %v686 = vpop.permute.xlu0 %685
  %687 = vrot.lane.b32.xlu0 %v644, 96
  %v688 = vpop.permute.xlu0 %687
  %689 = vrot.lane.b32.xlu0 %v645, 96
  %v690 = vpop.permute.xlu0 %689
  %691 = vrot.lane.b32.xlu0 %v646, 96
  %v692 = vpop.permute.xlu0 %691
  %693 = vrot.lane.b32.xlu0 %v647, 96
  %v694 = vpop.permute.xlu0 %693
  %695 = vrot.lane.b32.xlu0 %v648, 96
  %v696 = vpop.permute.xlu0 %695
  %v713 = vsel %vm95, %v666, 0.0
  %714 = vadd.xlane.f32.xlu0 %v713
  %v715 = vpop.xlane.xlu0 %714
  %v716 = vsel %vm95, %v668, 0.0
  %717 = vadd.xlane.f32.xlu0 %v716
  %v718 = vpop.xlane.xlu0 %717
  %v719 = vsel %vm95, %v670, 0.0
  %720 = vadd.xlane.f32.xlu0 %v719
  %v721 = vpop.xlane.xlu0 %720
  %v722 = vsel %vm95, %v672, 0.0
  %723 = vadd.xlane.f32.xlu0 %v722
  %v724 = vpop.xlane.xlu0 %723
  %v725 = vsel %vm95, %v674, 0.0
  %726 = vadd.xlane.f32.xlu0 %v725
  %v727 = vpop.xlane.xlu0 %726
  %v728 = vsel %vm95, %v676, 0.0
  %729 = vadd.xlane.f32.xlu0 %v728
  %v730 = vpop.xlane.xlu0 %729
  %v731 = vsel %vm95, %v678, 0.0
  %732 = vadd.xlane.f32.xlu0 %v731
  %v733 = vpop.xlane.xlu0 %732
  %v734 = vsel %vm95, %v680, 0.0
  %735 = vadd.xlane.f32.xlu0 %v734
  %v736 = vpop.xlane.xlu0 %735
  %v737 = vsel %vm95, %v682, 0.0
  %738 = vadd.xlane.f32.xlu0 %v737
  %v739 = vpop.xlane.xlu0 %738
  %v740 = vsel %vm95, %v684, 0.0
  %741 = vadd.xlane.f32.xlu0 %v740
  %v742 = vpop.xlane.xlu0 %741
  %v743 = vsel %vm95, %v686, 0.0
  %744 = vadd.xlane.f32.xlu0 %v743
  %v745 = vpop.xlane.xlu0 %744
  %v746 = vsel %vm95, %v688, 0.0
  %747 = vadd.xlane.f32.xlu0 %v746
  %v748 = vpop.xlane.xlu0 %747
  %v749 = vsel %vm95, %v690, 0.0
  %750 = vadd.xlane.f32.xlu0 %v749
  %v751 = vpop.xlane.xlu0 %750
  %v752 = vsel %vm95, %v692, 0.0
  %753 = vadd.xlane.f32.xlu0 %v752
  %v754 = vpop.xlane.xlu0 %753
  %v755 = vsel %vm95, %v694, 0.0
  %756 = vadd.xlane.f32.xlu0 %v755
  %v757 = vpop.xlane.xlu0 %756
  %v758 = vsel %vm95, %v696, 0.0
  %759 = vadd.xlane.f32.xlu0 %v758
  %v760 = vpop.xlane.xlu0 %759
  %vm761 = vcmp.gt.f32.partialorder %v161, 0.0
  %v778 = vperm.slane %v715, %v432
  %v779 = vadd.s32 %v432, 4294967288
  %v780 = vperm.slane %v718, %v779
  %vm781 = vcmask 130112
  %v782 = vsel %vm781, %v780, %v778
  %v783 = vperm.slane %v721, %v432
  %v784 = vperm.slane %v724, %v779
  %v785 = vsel %vm781, %v784, %v783
  %v786 = vperm.slane %v727, %v432
  %v787 = vperm.slane %v730, %v779
  %v788 = vsel %vm781, %v787, %v786
  %v789 = vperm.slane %v733, %v432
  %v790 = vperm.slane %v736, %v779
  %v791 = vsel %vm781, %v790, %v789
  %v792 = vperm.slane %v739, %v432
  %v793 = vperm.slane %v742, %v779
  %v794 = vsel %vm781, %v793, %v792
  %v795 = vperm.slane %v745, %v432
  %v796 = vperm.slane %v748, %v779
  %v797 = vsel %vm781, %v796, %v795
  %v798 = vperm.slane %v751, %v432
  %v799 = vperm.slane %v754, %v779
  %v800 = vsel %vm781, %v799, %v798
  %v801 = vperm.slane %v757, %v432
  %v802 = vperm.slane %v760, %v779
  %v803 = vsel %vm781, %v802, %v801
  %v804 = vsel %vm449, %v785, %v782
  %v805 = vsel %vm451, %v788, %v804
  %v806 = vsel %vm453, %v791, %v805
  %v807 = vsel %vm455, %v794, %v806
  %v808 = vsel %vm457, %v797, %v807
  %v809 = vsel %vm459, %v800, %v808
  %v810 = vsel %vm461, %v803, %v809
  %v812 = vsel %vm761, %v810, -1e+30
  %vm813 = vcmask 130048
  %v814 = vsel %vm813, %v812, -inf
  %815 = vmax.xlane.f32.xlu0 %v814
  %v816 = vpop.xlane.xlu0 %815
  %v817 = vsub.f32 %v812, %v816
  %v818 = vmul.f32 %v817, 1.442695
  %v819 = vpow.pop %v818
  %v820 = vmul.f32 %v819, %v161
  %v821 = vsel %vm813, %v820, 0.0
  %822 = vadd.xlane.f32.xlu0 %v821
  %v823 = vpop.xlane.xlu0 %822
  %vm824 = vcmp.gt.f32.partialorder %v823, 0.0
  %v825 = vsel %vm824, %v823, 1.0
  %v826 = vrcp.pop %v825
  %v827 = vmul.f32 %v820, %v826
  %v828 = vpack.c.bf16 %v827, %v827
  %v829 = vpack.c.bf16 %v533, %v532
  %v830 = vperm.slane %v165, 3
  %832 = vrot.lane.b32.xlu0 %v829, 96
  %v833 = vpop.permute.xlu0 %832
  %v836 = vsel %vm813, %v828, 0
  %838 = vmatpush.bf16.msra.mxu0 0
  %839 = vmatpush.bf16.msra.mxu0 0
  %840 = vmatpush.bf16.msra.mxu0 0
  %841 = vmatpush.bf16.msra.mxu0 0
  %842 = vmatpush.bf16.msra.mxu0 0
  %843 = vmatpush.bf16.msra.mxu0 0
  %844 = vmatpush.bf16.msra.mxu0 0
  %845 = vmatpush.bf16.msra.mxu0 %v833
  %846 = vmatmul.bf16.gmra.mxu0 %v836
  %v847 = vpop.f32.mrf.mxu0
  %v848 = vadd.f32 %v830, %v847
  %v849 = vpop.f32.mrf.mxu0
  %850 = vdwg.mxu0
  %v851 = vmax.f32 %v848, 0.0
  %v852 = vmax.f32 %v523, 0.0
  %v853 = vmax.f32 %v525, 0.0
  %v854 = vpack.c.bf16 %v851, %v851
  %v855 = vpack.c.bf16 %v853, %v852
  %v856 = vld [vmem:[%s16] sm:$0xf]
  %v857 = vld [vmem:[%s17] sm:$0xf]
  %v858 = vld [vmem:[%s12] sm:$0xf]
  %v859 = vld [vmem:[%s12 + $0x4] sm:$0xf]
  %v860 = vld [vmem:[%s12 + $0x8] sm:$0xf]
  %v861 = vld [vmem:[%s12 + $0xc] sm:$0xf]
  %v866 = vunpack.c.l.b16 %v858
  %v867 = vunpack.c.l.b16 %v859
  %v868 = vunpack.c.l.b16 %v860
  %v869 = vunpack.c.l.b16 %v861
  %v870 = vpack.c.b16 %v867, %v866
  %v871 = vpack.c.b16 %v869, %v868
  %v875 = vsel %vm95, %v854, 0
  %877 = vmatpush.bf16.msra.mxu0 0
  %878 = vmatpush.bf16.msra.mxu0 0
  %879 = vmatpush.bf16.msra.mxu0 0
  %880 = vmatpush.bf16.msra.mxu0 0
  %881 = vmatpush.bf16.msra.mxu0 0
  %882 = vmatpush.bf16.msra.mxu0 0
  %883 = vmatpush.bf16.msra.mxu0 %v871
  %884 = vmatpush.bf16.msra.mxu0 %v870
  %885 = vmatmul.bf16.gmra.mxu0 %v875
  %v886 = vpop.f32.mrf.mxu0
  %v887 = vadd.f32 0.0, %v886
  %v888 = vpop.f32.mrf.mxu0
  %889 = vdwg.mxu0
  %v890 = vld [vmem:[%s13] sm:$0xf]
  %v891 = vld [vmem:[%s13 + $0x4] sm:$0xf]
  %v892 = vld [vmem:[%s13 + $0x8] sm:$0xf]
  %v893 = vld [vmem:[%s13 + $0xc] sm:$0xf]
  %v898 = vunpack.c.l.b16 %v890
  %v899 = vunpack.c.l.b16 %v891
  %v900 = vunpack.c.l.b16 %v892
  %v901 = vunpack.c.l.b16 %v893
  %v902 = vpack.c.b16 %v899, %v898
  %v903 = vpack.c.b16 %v901, %v900
  %v907 = vsel %vm95, %v855, 0
  %909 = vmatpush.bf16.msra.mxu0 0
  %910 = vmatpush.bf16.msra.mxu0 0
  %911 = vmatpush.bf16.msra.mxu0 0
  %912 = vmatpush.bf16.msra.mxu0 0
  %913 = vmatpush.bf16.msra.mxu0 0
  %914 = vmatpush.bf16.msra.mxu0 0
  %915 = vmatpush.bf16.msra.mxu0 %v903
  %916 = vmatpush.bf16.msra.mxu0 %v902
  %917 = vmatmul.bf16.gmra.mxu0 %v907
  %v918 = vpop.f32.mrf.mxu0
  %v919 = vadd.f32 0.0, %v918
  %v920 = vpop.f32.mrf.mxu0
  %v921 = vadd.f32 0.0, %v920
  %922 = vdwg.mxu0
  %v923 = vperm.slane %v856, 0
  %v924 = vadd.f32 %v887, %v923
  %v925 = vperm.slane %v856, 1
  %v926 = vadd.f32 %v919, %v925
  %v927 = vadd.f32 %v921, %v925
  %v930 = vrot.slane %v926, 1
  %v931 = vrot.slane %v926, 2
  %v932 = vrot.slane %v926, 3
  %v933 = vrot.slane %v926, 4
  %v934 = vrot.slane %v926, 5
  %v935 = vrot.slane %v926, 6
  %v936 = vrot.slane %v926, 7
  %v937 = vrot.slane %v927, 1
  %v938 = vrot.slane %v927, 2
  %v939 = vrot.slane %v927, 3
  %v940 = vrot.slane %v927, 4
  %v941 = vrot.slane %v927, 5
  %v942 = vrot.slane %v927, 6
  %v943 = vrot.slane %v927, 7
  %v944 = vperm.slane %v926, 0
  %v945 = vperm.slane %v930, 0
  %v946 = vperm.slane %v931, 0
  %v947 = vperm.slane %v932, 0
  %v948 = vperm.slane %v933, 0
  %v949 = vperm.slane %v934, 0
  %v950 = vperm.slane %v935, 0
  %v951 = vperm.slane %v936, 0
  %v952 = vperm.slane %v927, 0
  %v953 = vperm.slane %v937, 0
  %v954 = vperm.slane %v938, 0
  %v955 = vperm.slane %v939, 0
  %v956 = vperm.slane %v940, 0
  %v957 = vperm.slane %v941, 0
  %v958 = vperm.slane %v942, 0
  %v959 = vperm.slane %v943, 0
  %v976 = vadd.f32 %v944, %v924
  %v977 = vadd.f32 %v945, %v924
  %v978 = vadd.f32 %v946, %v924
  %v979 = vadd.f32 %v947, %v924
  %v980 = vadd.f32 %v948, %v924
  %v981 = vadd.f32 %v949, %v924
  %v982 = vadd.f32 %v950, %v924
  %v983 = vadd.f32 %v951, %v924
  %v984 = vadd.f32 %v952, %v924
  %v985 = vadd.f32 %v953, %v924
  %v986 = vadd.f32 %v954, %v924
  %v987 = vadd.f32 %v955, %v924
  %v988 = vadd.f32 %v956, %v924
  %v989 = vadd.f32 %v957, %v924
  %v990 = vadd.f32 %v958, %v924
  %v991 = vadd.f32 %v959, %v924
  %vm992 = vcmp.gt.f32.partialorder %v976, 0.0
  %vm993 = vcmp.gt.f32.partialorder %v977, 0.0
  %vm994 = vcmp.gt.f32.partialorder %v978, 0.0
  %vm995 = vcmp.gt.f32.partialorder %v979, 0.0
  %vm996 = vcmp.gt.f32.partialorder %v980, 0.0
  %vm997 = vcmp.gt.f32.partialorder %v981, 0.0
  %vm998 = vcmp.gt.f32.partialorder %v982, 0.0
  %vm999 = vcmp.gt.f32.partialorder %v983, 0.0
  %vm1000 = vcmp.gt.f32.partialorder %v984, 0.0
  %vm1001 = vcmp.gt.f32.partialorder %v985, 0.0
  %vm1002 = vcmp.gt.f32.partialorder %v986, 0.0
  %vm1003 = vcmp.gt.f32.partialorder %v987, 0.0
  %vm1004 = vcmp.gt.f32.partialorder %v988, 0.0
  %vm1005 = vcmp.gt.f32.partialorder %v989, 0.0
  %vm1006 = vcmp.gt.f32.partialorder %v990, 0.0
  %vm1007 = vcmp.gt.f32.partialorder %v991, 0.0
  %v1008 = vmul.f32 %v976, 0.2
  %v1009 = vmul.f32 %v977, 0.2
  %v1010 = vmul.f32 %v978, 0.2
  %v1011 = vmul.f32 %v979, 0.2
  %v1012 = vmul.f32 %v980, 0.2
  %v1013 = vmul.f32 %v981, 0.2
  %v1014 = vmul.f32 %v982, 0.2
  %v1015 = vmul.f32 %v983, 0.2
  %v1016 = vmul.f32 %v984, 0.2
  %v1017 = vmul.f32 %v985, 0.2
  %v1018 = vmul.f32 %v986, 0.2
  %v1019 = vmul.f32 %v987, 0.2
  %v1020 = vmul.f32 %v988, 0.2
  %v1021 = vmul.f32 %v989, 0.2
  %v1022 = vmul.f32 %v990, 0.2
  %v1023 = vmul.f32 %v991, 0.2
  %v1024 = vsel %vm992, %v976, %v1008
  %v1025 = vsel %vm993, %v977, %v1009
  %v1026 = vsel %vm994, %v978, %v1010
  %v1027 = vsel %vm995, %v979, %v1011
  %v1028 = vsel %vm996, %v980, %v1012
  %v1029 = vsel %vm997, %v981, %v1013
  %v1030 = vsel %vm998, %v982, %v1014
  %v1031 = vsel %vm999, %v983, %v1015
  %v1032 = vsel %vm1000, %v984, %v1016
  %v1033 = vsel %vm1001, %v985, %v1017
  %v1034 = vsel %vm1002, %v986, %v1018
  %v1035 = vsel %vm1003, %v987, %v1019
  %v1036 = vsel %vm1004, %v988, %v1020
  %v1037 = vsel %vm1005, %v989, %v1021
  %v1038 = vsel %vm1006, %v990, %v1022
  %v1039 = vsel %vm1007, %v991, %v1023
  %v1040 = vperm.slane %v856, 2
  %v1041 = vmul.f32 %v1024, %v1040
  %v1042 = vmul.f32 %v1025, %v1040
  %v1043 = vmul.f32 %v1026, %v1040
  %v1044 = vmul.f32 %v1027, %v1040
  %v1045 = vmul.f32 %v1028, %v1040
  %v1046 = vmul.f32 %v1029, %v1040
  %v1047 = vmul.f32 %v1030, %v1040
  %v1048 = vmul.f32 %v1031, %v1040
  %v1049 = vmul.f32 %v1032, %v1040
  %v1050 = vmul.f32 %v1033, %v1040
  %v1051 = vmul.f32 %v1034, %v1040
  %v1052 = vmul.f32 %v1035, %v1040
  %v1053 = vmul.f32 %v1036, %v1040
  %v1054 = vmul.f32 %v1037, %v1040
  %v1055 = vmul.f32 %v1038, %v1040
  %v1056 = vmul.f32 %v1039, %v1040
  %v1057 = vsel %vm95, %v1041, 0.0
  %1058 = vadd.xlane.f32.xlu0 %v1057
  %v1059 = vpop.xlane.xlu0 %1058
  %v1060 = vsel %vm95, %v1042, 0.0
  %1061 = vadd.xlane.f32.xlu0 %v1060
  %v1062 = vpop.xlane.xlu0 %1061
  %v1063 = vsel %vm95, %v1043, 0.0
  %1064 = vadd.xlane.f32.xlu0 %v1063
  %v1065 = vpop.xlane.xlu0 %1064
  %v1066 = vsel %vm95, %v1044, 0.0
  %1067 = vadd.xlane.f32.xlu0 %v1066
  %v1068 = vpop.xlane.xlu0 %1067
  %v1069 = vsel %vm95, %v1045, 0.0
  %1070 = vadd.xlane.f32.xlu0 %v1069
  %v1071 = vpop.xlane.xlu0 %1070
  %v1072 = vsel %vm95, %v1046, 0.0
  %1073 = vadd.xlane.f32.xlu0 %v1072
  %v1074 = vpop.xlane.xlu0 %1073
  %v1075 = vsel %vm95, %v1047, 0.0
  %1076 = vadd.xlane.f32.xlu0 %v1075
  %v1077 = vpop.xlane.xlu0 %1076
  %v1078 = vsel %vm95, %v1048, 0.0
  %1079 = vadd.xlane.f32.xlu0 %v1078
  %v1080 = vpop.xlane.xlu0 %1079
  %v1081 = vsel %vm95, %v1049, 0.0
  %1082 = vadd.xlane.f32.xlu0 %v1081
  %v1083 = vpop.xlane.xlu0 %1082
  %v1084 = vsel %vm95, %v1050, 0.0
  %1085 = vadd.xlane.f32.xlu0 %v1084
  %v1086 = vpop.xlane.xlu0 %1085
  %v1087 = vsel %vm95, %v1051, 0.0
  %1088 = vadd.xlane.f32.xlu0 %v1087
  %v1089 = vpop.xlane.xlu0 %1088
  %v1090 = vsel %vm95, %v1052, 0.0
  %1091 = vadd.xlane.f32.xlu0 %v1090
  %v1092 = vpop.xlane.xlu0 %1091
  %v1093 = vsel %vm95, %v1053, 0.0
  %1094 = vadd.xlane.f32.xlu0 %v1093
  %v1095 = vpop.xlane.xlu0 %1094
  %v1096 = vsel %vm95, %v1054, 0.0
  %1097 = vadd.xlane.f32.xlu0 %v1096
  %v1098 = vpop.xlane.xlu0 %1097
  %v1099 = vsel %vm95, %v1055, 0.0
  %1100 = vadd.xlane.f32.xlu0 %v1099
  %v1101 = vpop.xlane.xlu0 %1100
  %v1102 = vsel %vm95, %v1056, 0.0
  %1103 = vadd.xlane.f32.xlu0 %v1102
  %v1104 = vpop.xlane.xlu0 %1103
  %v1121 = vperm.slane %v1059, %v432
  %v1122 = vperm.slane %v1062, %v432
  %v1123 = vperm.slane %v1065, %v432
  %v1124 = vperm.slane %v1068, %v432
  %v1125 = vperm.slane %v1071, %v432
  %v1126 = vperm.slane %v1074, %v432
  %v1127 = vperm.slane %v1077, %v432
  %v1128 = vperm.slane %v1080, %v432
  %v1129 = vperm.slane %v1083, %v432
  %v1130 = vperm.slane %v1086, %v432
  %v1131 = vperm.slane %v1089, %v432
  %v1132 = vperm.slane %v1092, %v432
  %v1133 = vperm.slane %v1095, %v432
  %v1134 = vperm.slane %v1098, %v432
  %v1135 = vperm.slane %v1101, %v432
  %v1136 = vperm.slane %v1104, %v432
  %v1137 = vsel %vm449, %v1122, %v1121
  %v1138 = vsel %vm451, %v1123, %v1137
  %v1139 = vsel %vm453, %v1124, %v1138
  %v1140 = vsel %vm455, %v1125, %v1139
  %v1141 = vsel %vm457, %v1126, %v1140
  %v1142 = vsel %vm459, %v1127, %v1141
  %v1143 = vsel %vm461, %v1128, %v1142
  %v1144 = vsel %vm449, %v1130, %v1129
  %v1145 = vsel %vm451, %v1131, %v1144
  %v1146 = vsel %vm453, %v1132, %v1145
  %v1147 = vsel %vm455, %v1133, %v1146
  %v1148 = vsel %vm457, %v1134, %v1147
  %v1149 = vsel %vm459, %v1135, %v1148
  %v1150 = vsel %vm461, %v1136, %v1149
  %v1153 = vsel %vm413, %v1143, -1e+30
  %v1154 = vsel %vm414, %v1150, -1e+30
  %v1155 = vsel %vm474, %v1153, -inf
  %1156 = vmax.xlane.f32.xlu0 %v1155
  %v1157 = vpop.xlane.xlu0 %1156
  %v1158 = vsel %vm474, %v1154, -inf
  %1159 = vmax.xlane.f32.xlu0 %v1158
  %v1160 = vpop.xlane.xlu0 %1159
  %v1161 = vsub.f32 %v1153, %v1157
  %v1162 = vsub.f32 %v1154, %v1160
  %v1163 = vmul.f32 %v1161, 1.442695
  %v1164 = vpow.pop %v1163
  %v1165 = vmul.f32 %v1162, 1.442695
  %v1166 = vpow.pop %v1165
  %v1167 = vmul.f32 %v1164, %v158
  %v1168 = vmul.f32 %v1166, %v159
  %v1169 = vsel %vm474, %v1167, 0.0
  %1170 = vadd.xlane.f32.xlu0 %v1169
  %v1171 = vpop.xlane.xlu0 %1170
  %v1172 = vsel %vm474, %v1168, 0.0
  %1173 = vadd.xlane.f32.xlu0 %v1172
  %v1174 = vpop.xlane.xlu0 %1173
  %vm1175 = vcmp.gt.f32.partialorder %v1171, 0.0
  %vm1176 = vcmp.gt.f32.partialorder %v1174, 0.0
  %v1177 = vsel %vm1175, %v1171, 1.0
  %v1178 = vsel %vm1176, %v1174, 1.0
  %v1179 = vrcp.pop %v1177
  %v1180 = vrcp.pop %v1178
  %v1181 = vmul.f32 %v1167, %v1179
  %v1182 = vmul.f32 %v1168, %v1180
  %v1183 = vpack.c.bf16 %v1182, %v1181
  %v1184 = vpack.c.bf16 %v924, %v924
  %v1185 = vperm.slane %v856, 3
  %v1187 = vsel %vm474, %v1183, 0
  %v1190 = vsel %vm509, %v1184, 0
  %1192 = vmatpush.bf16.msra.mxu0 0
  %1193 = vmatpush.bf16.msra.mxu0 0
  %1194 = vmatpush.bf16.msra.mxu0 0
  %1195 = vmatpush.bf16.msra.mxu0 0
  %1196 = vmatpush.bf16.msra.mxu0 0
  %1197 = vmatpush.bf16.msra.mxu0 0
  %1198 = vmatpush.bf16.msra.mxu0 0
  %1199 = vmatpush.bf16.msra.mxu0 %v1190
  %1200 = vmatmul.bf16.gmra.mxu0 %v1187
  %v1201 = vpop.f32.mrf.mxu0
  %v1202 = vadd.f32 %v1185, %v1201
  %v1203 = vpop.f32.mrf.mxu0
  %v1204 = vadd.f32 %v1185, %v1203
  %1205 = vdwg.mxu0
  %v1206 = vperm.slane %v857, 0
  %1208 = vrot.lane.b32.xlu0 %v1206, 32
  %v1209 = vpop.permute.xlu0 %1208
  %v1211 = vadd.f32 %v919, %v1209
  %v1212 = vadd.f32 %v921, %v1209
  %v1213 = vperm.slane %v857, 1
  %1215 = vrot.lane.b32.xlu0 %v1213, 32
  %v1216 = vpop.permute.xlu0 %1215
  %v1218 = vadd.f32 %v887, %v1216
  %v1220 = vrot.slane %v1218, 1
  %v1221 = vrot.slane %v1218, 2
  %v1222 = vrot.slane %v1218, 3
  %v1223 = vrot.slane %v1218, 4
  %v1224 = vrot.slane %v1218, 5
  %v1225 = vrot.slane %v1218, 6
  %v1226 = vrot.slane %v1218, 7
  %v1227 = vperm.slane %v1218, 0
  %v1228 = vperm.slane %v1220, 0
  %v1229 = vperm.slane %v1221, 0
  %v1230 = vperm.slane %v1222, 0
  %v1231 = vperm.slane %v1223, 0
  %v1232 = vperm.slane %v1224, 0
  %v1233 = vperm.slane %v1225, 0
  %v1234 = vperm.slane %v1226, 0
  %v1243 = vadd.f32 %v1227, %v1211
  %v1244 = vadd.f32 %v1227, %v1212
  %v1245 = vadd.f32 %v1228, %v1211
  %v1246 = vadd.f32 %v1228, %v1212
  %v1247 = vadd.f32 %v1229, %v1211
  %v1248 = vadd.f32 %v1229, %v1212
  %v1249 = vadd.f32 %v1230, %v1211
  %v1250 = vadd.f32 %v1230, %v1212
  %v1251 = vadd.f32 %v1231, %v1211
  %v1252 = vadd.f32 %v1231, %v1212
  %v1253 = vadd.f32 %v1232, %v1211
  %v1254 = vadd.f32 %v1232, %v1212
  %v1255 = vadd.f32 %v1233, %v1211
  %v1256 = vadd.f32 %v1233, %v1212
  %v1257 = vadd.f32 %v1234, %v1211
  %v1258 = vadd.f32 %v1234, %v1212
  %vm1259 = vcmp.gt.f32.partialorder %v1243, 0.0
  %vm1260 = vcmp.gt.f32.partialorder %v1244, 0.0
  %vm1261 = vcmp.gt.f32.partialorder %v1245, 0.0
  %vm1262 = vcmp.gt.f32.partialorder %v1246, 0.0
  %vm1263 = vcmp.gt.f32.partialorder %v1247, 0.0
  %vm1264 = vcmp.gt.f32.partialorder %v1248, 0.0
  %vm1265 = vcmp.gt.f32.partialorder %v1249, 0.0
  %vm1266 = vcmp.gt.f32.partialorder %v1250, 0.0
  %vm1267 = vcmp.gt.f32.partialorder %v1251, 0.0
  %vm1268 = vcmp.gt.f32.partialorder %v1252, 0.0
  %vm1269 = vcmp.gt.f32.partialorder %v1253, 0.0
  %vm1270 = vcmp.gt.f32.partialorder %v1254, 0.0
  %vm1271 = vcmp.gt.f32.partialorder %v1255, 0.0
  %vm1272 = vcmp.gt.f32.partialorder %v1256, 0.0
  %vm1273 = vcmp.gt.f32.partialorder %v1257, 0.0
  %vm1274 = vcmp.gt.f32.partialorder %v1258, 0.0
  %v1275 = vmul.f32 %v1243, 0.2
  %v1276 = vmul.f32 %v1244, 0.2
  %v1277 = vmul.f32 %v1245, 0.2
  %v1278 = vmul.f32 %v1246, 0.2
  %v1279 = vmul.f32 %v1247, 0.2
  %v1280 = vmul.f32 %v1248, 0.2
  %v1281 = vmul.f32 %v1249, 0.2
  %v1282 = vmul.f32 %v1250, 0.2
  %v1283 = vmul.f32 %v1251, 0.2
  %v1284 = vmul.f32 %v1252, 0.2
  %v1285 = vmul.f32 %v1253, 0.2
  %v1286 = vmul.f32 %v1254, 0.2
  %v1287 = vmul.f32 %v1255, 0.2
  %v1288 = vmul.f32 %v1256, 0.2
  %v1289 = vmul.f32 %v1257, 0.2
  %v1290 = vmul.f32 %v1258, 0.2
  %v1291 = vsel %vm1259, %v1243, %v1275
  %v1292 = vsel %vm1260, %v1244, %v1276
  %v1293 = vsel %vm1261, %v1245, %v1277
  %v1294 = vsel %vm1262, %v1246, %v1278
  %v1295 = vsel %vm1263, %v1247, %v1279
  %v1296 = vsel %vm1264, %v1248, %v1280
  %v1297 = vsel %vm1265, %v1249, %v1281
  %v1298 = vsel %vm1266, %v1250, %v1282
  %v1299 = vsel %vm1267, %v1251, %v1283
  %v1300 = vsel %vm1268, %v1252, %v1284
  %v1301 = vsel %vm1269, %v1253, %v1285
  %v1302 = vsel %vm1270, %v1254, %v1286
  %v1303 = vsel %vm1271, %v1255, %v1287
  %v1304 = vsel %vm1272, %v1256, %v1288
  %v1305 = vsel %vm1273, %v1257, %v1289
  %v1306 = vsel %vm1274, %v1258, %v1290
  %v1307 = vperm.slane %v857, 2
  %1309 = vrot.lane.b32.xlu0 %v1307, 32
  %v1310 = vpop.permute.xlu0 %1309
  %v1312 = vmul.f32 %v1291, %v1310
  %v1313 = vmul.f32 %v1292, %v1310
  %v1314 = vmul.f32 %v1293, %v1310
  %v1315 = vmul.f32 %v1294, %v1310
  %v1316 = vmul.f32 %v1295, %v1310
  %v1317 = vmul.f32 %v1296, %v1310
  %v1318 = vmul.f32 %v1297, %v1310
  %v1319 = vmul.f32 %v1298, %v1310
  %v1320 = vmul.f32 %v1299, %v1310
  %v1321 = vmul.f32 %v1300, %v1310
  %v1322 = vmul.f32 %v1301, %v1310
  %v1323 = vmul.f32 %v1302, %v1310
  %v1324 = vmul.f32 %v1303, %v1310
  %v1325 = vmul.f32 %v1304, %v1310
  %v1326 = vmul.f32 %v1305, %v1310
  %v1327 = vmul.f32 %v1306, %v1310
  %1344 = vrot.lane.b32.xlu0 %v1312, 96
  %v1345 = vpop.permute.xlu0 %1344
  %1346 = vrot.lane.b32.xlu0 %v1313, 96
  %v1347 = vpop.permute.xlu0 %1346
  %1348 = vrot.lane.b32.xlu0 %v1314, 96
  %v1349 = vpop.permute.xlu0 %1348
  %1350 = vrot.lane.b32.xlu0 %v1315, 96
  %v1351 = vpop.permute.xlu0 %1350
  %1352 = vrot.lane.b32.xlu0 %v1316, 96
  %v1353 = vpop.permute.xlu0 %1352
  %1354 = vrot.lane.b32.xlu0 %v1317, 96
  %v1355 = vpop.permute.xlu0 %1354
  %1356 = vrot.lane.b32.xlu0 %v1318, 96
  %v1357 = vpop.permute.xlu0 %1356
  %1358 = vrot.lane.b32.xlu0 %v1319, 96
  %v1359 = vpop.permute.xlu0 %1358
  %1360 = vrot.lane.b32.xlu0 %v1320, 96
  %v1361 = vpop.permute.xlu0 %1360
  %1362 = vrot.lane.b32.xlu0 %v1321, 96
  %v1363 = vpop.permute.xlu0 %1362
  %1364 = vrot.lane.b32.xlu0 %v1322, 96
  %v1365 = vpop.permute.xlu0 %1364
  %1366 = vrot.lane.b32.xlu0 %v1323, 96
  %v1367 = vpop.permute.xlu0 %1366
  %1368 = vrot.lane.b32.xlu0 %v1324, 96
  %v1369 = vpop.permute.xlu0 %1368
  %1370 = vrot.lane.b32.xlu0 %v1325, 96
  %v1371 = vpop.permute.xlu0 %1370
  %1372 = vrot.lane.b32.xlu0 %v1326, 96
  %v1373 = vpop.permute.xlu0 %1372
  %1374 = vrot.lane.b32.xlu0 %v1327, 96
  %v1375 = vpop.permute.xlu0 %1374
  %v1392 = vsel %vm95, %v1345, 0.0
  %1393 = vadd.xlane.f32.xlu0 %v1392
  %v1394 = vpop.xlane.xlu0 %1393
  %v1395 = vsel %vm95, %v1347, 0.0
  %1396 = vadd.xlane.f32.xlu0 %v1395
  %v1397 = vpop.xlane.xlu0 %1396
  %v1398 = vsel %vm95, %v1349, 0.0
  %1399 = vadd.xlane.f32.xlu0 %v1398
  %v1400 = vpop.xlane.xlu0 %1399
  %v1401 = vsel %vm95, %v1351, 0.0
  %1402 = vadd.xlane.f32.xlu0 %v1401
  %v1403 = vpop.xlane.xlu0 %1402
  %v1404 = vsel %vm95, %v1353, 0.0
  %1405 = vadd.xlane.f32.xlu0 %v1404
  %v1406 = vpop.xlane.xlu0 %1405
  %v1407 = vsel %vm95, %v1355, 0.0
  %1408 = vadd.xlane.f32.xlu0 %v1407
  %v1409 = vpop.xlane.xlu0 %1408
  %v1410 = vsel %vm95, %v1357, 0.0
  %1411 = vadd.xlane.f32.xlu0 %v1410
  %v1412 = vpop.xlane.xlu0 %1411
  %v1413 = vsel %vm95, %v1359, 0.0
  %1414 = vadd.xlane.f32.xlu0 %v1413
  %v1415 = vpop.xlane.xlu0 %1414
  %v1416 = vsel %vm95, %v1361, 0.0
  %1417 = vadd.xlane.f32.xlu0 %v1416
  %v1418 = vpop.xlane.xlu0 %1417
  %v1419 = vsel %vm95, %v1363, 0.0
  %1420 = vadd.xlane.f32.xlu0 %v1419
  %v1421 = vpop.xlane.xlu0 %1420
  %v1422 = vsel %vm95, %v1365, 0.0
  %1423 = vadd.xlane.f32.xlu0 %v1422
  %v1424 = vpop.xlane.xlu0 %1423
  %v1425 = vsel %vm95, %v1367, 0.0
  %1426 = vadd.xlane.f32.xlu0 %v1425
  %v1427 = vpop.xlane.xlu0 %1426
  %v1428 = vsel %vm95, %v1369, 0.0
  %1429 = vadd.xlane.f32.xlu0 %v1428
  %v1430 = vpop.xlane.xlu0 %1429
  %v1431 = vsel %vm95, %v1371, 0.0
  %1432 = vadd.xlane.f32.xlu0 %v1431
  %v1433 = vpop.xlane.xlu0 %1432
  %v1434 = vsel %vm95, %v1373, 0.0
  %1435 = vadd.xlane.f32.xlu0 %v1434
  %v1436 = vpop.xlane.xlu0 %1435
  %v1437 = vsel %vm95, %v1375, 0.0
  %1438 = vadd.xlane.f32.xlu0 %v1437
  %v1439 = vpop.xlane.xlu0 %1438
  %v1456 = vperm.slane %v1394, %v432
  %v1457 = vperm.slane %v1397, %v779
  %v1458 = vsel %vm781, %v1457, %v1456
  %v1459 = vperm.slane %v1400, %v432
  %v1460 = vperm.slane %v1403, %v779
  %v1461 = vsel %vm781, %v1460, %v1459
  %v1462 = vperm.slane %v1406, %v432
  %v1463 = vperm.slane %v1409, %v779
  %v1464 = vsel %vm781, %v1463, %v1462
  %v1465 = vperm.slane %v1412, %v432
  %v1466 = vperm.slane %v1415, %v779
  %v1467 = vsel %vm781, %v1466, %v1465
  %v1468 = vperm.slane %v1418, %v432
  %v1469 = vperm.slane %v1421, %v779
  %v1470 = vsel %vm781, %v1469, %v1468
  %v1471 = vperm.slane %v1424, %v432
  %v1472 = vperm.slane %v1427, %v779
  %v1473 = vsel %vm781, %v1472, %v1471
  %v1474 = vperm.slane %v1430, %v432
  %v1475 = vperm.slane %v1433, %v779
  %v1476 = vsel %vm781, %v1475, %v1474
  %v1477 = vperm.slane %v1436, %v432
  %v1478 = vperm.slane %v1439, %v779
  %v1479 = vsel %vm781, %v1478, %v1477
  %v1480 = vsel %vm449, %v1461, %v1458
  %v1481 = vsel %vm451, %v1464, %v1480
  %v1482 = vsel %vm453, %v1467, %v1481
  %v1483 = vsel %vm455, %v1470, %v1482
  %v1484 = vsel %vm457, %v1473, %v1483
  %v1485 = vsel %vm459, %v1476, %v1484
  %v1486 = vsel %vm461, %v1479, %v1485
  %v1488 = vsel %vm761, %v1486, -1e+30
  %v1489 = vsel %vm813, %v1488, -inf
  %1490 = vmax.xlane.f32.xlu0 %v1489
  %v1491 = vpop.xlane.xlu0 %1490
  %v1492 = vsub.f32 %v1488, %v1491
  %v1493 = vmul.f32 %v1492, 1.442695
  %v1494 = vpow.pop %v1493
  %v1495 = vmul.f32 %v1494, %v161
  %v1496 = vsel %vm813, %v1495, 0.0
  %1497 = vadd.xlane.f32.xlu0 %v1496
  %v1498 = vpop.xlane.xlu0 %1497
  %vm1499 = vcmp.gt.f32.partialorder %v1498, 0.0
  %v1500 = vsel %vm1499, %v1498, 1.0
  %v1501 = vrcp.pop %v1500
  %v1502 = vmul.f32 %v1495, %v1501
  %v1503 = vpack.c.bf16 %v1502, %v1502
  %v1504 = vpack.c.bf16 %v1212, %v1211
  %v1505 = vperm.slane %v857, 3
  %1507 = vrot.lane.b32.xlu0 %v1504, 96
  %v1508 = vpop.permute.xlu0 %1507
  %v1511 = vsel %vm813, %v1503, 0
  %1513 = vmatpush.bf16.msra.mxu0 0
  %1514 = vmatpush.bf16.msra.mxu0 0
  %1515 = vmatpush.bf16.msra.mxu0 0
  %1516 = vmatpush.bf16.msra.mxu0 0
  %1517 = vmatpush.bf16.msra.mxu0 0
  %1518 = vmatpush.bf16.msra.mxu0 0
  %1519 = vmatpush.bf16.msra.mxu0 0
  %1520 = vmatpush.bf16.msra.mxu0 %v1508
  %1521 = vmatmul.bf16.gmra.mxu0 %v1511
  %v1522 = vpop.f32.mrf.mxu0
  %v1523 = vadd.f32 %v1505, %v1522
  %v1524 = vpop.f32.mrf.mxu0
  %1525 = vdwg.mxu0
  %v1526 = vld [vmem:[%s18] sm:$0x1]
  %v1527 = vpack.c.bf16 %v1523, %v1523
  %v1529 = vsel %vm95, %v1526, 0
  %v1532 = vsel %vm95, %v1527, 0
  %1534 = vmatpush.bf16.xpose.msra.mxu0 0
  %1535 = vmatpush.bf16.xpose.msra.mxu0 0
  %1536 = vmatpush.bf16.xpose.msra.mxu0 0
  %1537 = vmatpush.bf16.xpose.msra.mxu0 0
  %1538 = vmatpush.bf16.xpose.msra.mxu0 0
  %1539 = vmatpush.bf16.xpose.msra.mxu0 0
  %1540 = vmatpush.bf16.xpose.msra.mxu0 0
  %1541 = vmatpush.bf16.xpose.msra.mxu0 %v1532
  %1542 = vmatmul.bf16.gmra.mxu0 %v1529
  %v1543 = vpop.f32.mrf.mxu0
  %v1544 = vadd.f32 0.0, %v1543
  %v1545 = vpop.f32.mrf.mxu0
  %1546 = vdwg.mxu0
  %v1547 = vld [vmem:[%s19] sm:$0x1]
  %v1548 = vpack.c.bf16 %v1204, %v1202
  %v1550 = vsel %vm95, %v1547, 0
  %v1553 = vsel %vm95, %v1548, 0
  %1555 = vmatpush.bf16.xpose.msra.mxu0 0
  %1556 = vmatpush.bf16.xpose.msra.mxu0 0
  %1557 = vmatpush.bf16.xpose.msra.mxu0 0
  %1558 = vmatpush.bf16.xpose.msra.mxu0 0
  %1559 = vmatpush.bf16.xpose.msra.mxu0 0
  %1560 = vmatpush.bf16.xpose.msra.mxu0 0
  %1561 = vmatpush.bf16.xpose.msra.mxu0 0
  %1562 = vmatpush.bf16.xpose.msra.mxu0 %v1553
  %1563 = vmatmul.bf16.gmra.mxu0 %v1550
  %v1564 = vpop.f32.mrf.mxu0
  %v1565 = vadd.f32 0.0, %v1564
  %v1566 = vpop.f32.mrf.mxu0
  %1567 = vdwg.mxu0
  %v1568 = vpack.c.bf16 %v1544, %v1544
  %v1569 = vld [vmem:[%s4] sm:$0xf]
  %v1570 = vpack.c.bf16 %v1565, %v1565
  %v1571 = vld [vmem:[%s5] sm:$0xf]
  %v1572 = vld [vmem:[%s5 + $0x4] sm:$0xf]
  %v1575 = vunpack.c.l.b16 %v1571
  %v1576 = vunpack.c.l.b16 %v1572
  %v1577 = vpack.c.b16 %v1576, %v1575
  %v1580 = vsel %vm813, %v1570, 0
  %1582 = vmatpush.bf16.msra.mxu0 0
  %1583 = vmatpush.bf16.msra.mxu0 0
  %1584 = vmatpush.bf16.msra.mxu0 0
  %1585 = vmatpush.bf16.msra.mxu0 0
  %1586 = vmatpush.bf16.msra.mxu0 0
  %1587 = vmatpush.bf16.msra.mxu0 0
  %1588 = vmatpush.bf16.msra.mxu0 0
  %1589 = vmatpush.bf16.msra.mxu0 %v1577
  %1590 = vmatmul.bf16.gmra.mxu0 %v1580
  %v1591 = vpop.f32.mrf.mxu0
  %v1592 = vadd.f32 0.0, %v1591
  %v1593 = vpop.f32.mrf.mxu0
  %1594 = vdwg.mxu0
  %v1596 = vsel %vm474, %v1568, 0
  %v1599 = vsel %vm509, %v1569, 0
  %1601 = vmatpush.bf16.msra.mxu0 0
  %1602 = vmatpush.bf16.msra.mxu0 0
  %1603 = vmatpush.bf16.msra.mxu0 0
  %1604 = vmatpush.bf16.msra.mxu0 0
  %1605 = vmatpush.bf16.msra.mxu0 0
  %1606 = vmatpush.bf16.msra.mxu0 0
  %1607 = vmatpush.bf16.msra.mxu0 0
  %1608 = vmatpush.bf16.msra.mxu0 %v1599
  %1609 = vmatmul.bf16.gmra.mxu0 %v1596
  %v1610 = vpop.f32.mrf.mxu0
  %v1611 = vadd.f32 %v1592, %v1610
  %v1612 = vpop.f32.mrf.mxu0
  %1613 = vdwg.mxu0
  %v1614 = vld [vmem:[#allocation2] sm:$0x1]
  %1616 = vset.pattern.permute.xlu0 0
  %1617 = vperm.xlu0 %1616, %v1614
  %v1618 = vpop.permute.xlu0 %1617
  %v1620 = vperm.slane %v1618, 0
  %v1621 = vadd.f32 %v1611, %v1620
  %1622 = vst [vmem:[%s21] sm:$0x1] %v1621
  // Predicated region
  $region86: #{linkpred_forward.1} parent=0 // pred_check
    _
  $region87: #{linkpred_forward.1} parent=0 // pred_check_branch
    %1624 = sbr.rel (0) target = $region89
  $region88: #{linkpred_forward.1} parent=0 // pred_region
    _
  $region89: #{linkpred_forward.1} parent=0 // pred_fallthru
    _
  // Predicated region
  $region90: #{linkpred_forward.1} parent=0 // pred_check
    _
  $region91: #{linkpred_forward.1} parent=0 // pred_check_branch
    %1626 = sbr.rel (0) target = $region93
  $region92: #{linkpred_forward.1} parent=0 // pred_region
    _
  $region93: #{linkpred_forward.1} parent=0 // pred_fallthru
    _

</llo_original>
